<compile_context>
chip_gen: v6e
topology: v6e:2x2x1
jax: 0.10.0
libtpu: 0.0.40
codegen_flags: <defaults>
</compile_context>

<pallas_src>
import math
import functools

import jax
import jax.numpy as jnp
from jax import lax
from jax.experimental import pallas as pl
from jax.experimental.pallas import tpu as pltpu


def _video_embed_kernel(x_ref, pe_ref, wqkv_ref, bqkv_ref, wo_ref, bo_ref, o_ref,
                        *, num_heads):
    """One grid step == one batch element: pos-enc add + multi-head self-attention."""
    _, S, E = x_ref.shape
    hd = E // num_heads

    pe = pe_ref[...]             # (S, E)
    wqkv = wqkv_ref[...]         # (E, 3E)  pre-transposed; Q columns pre-scaled by 1/sqrt(hd)
    bqkv = bqkv_ref[...]         # (1, 3E)  Q bias pre-scaled
    woT = wo_ref[...]            # (E, E)   pre-transposed
    bo = bo_ref[...]             # (1, E)

    # Positional-encoding add: one broadcast VALU add (no per-batch concat loop).
    xb = x_ref[0] + pe                                                      # (S, E)

    # Fused Q/K/V projection: a single MXU matmul + bias add.
    qkv = jnp.dot(xb, wqkv, preferred_element_type=jnp.float32) + bqkv      # (S, 3E)

    # Accumulate per-head output-projection contributions (no lane-axis concat).
    acc = jnp.broadcast_to(bo, (S, E)).astype(jnp.float32)                  # (S, E)
    for h in range(num_heads):
        lo = h * hd
        # TODO(synk): at larger num_heads, switch to a sublane-aligned
        #   (transposed) per-head layout to avoid these narrow lane slices.
        qh = qkv[:, lo:lo + hd]                    # (S, hd)  scale already folded into weights
        kh = qkv[:, E + lo:E + lo + hd]            # (S, hd)
        vh = qkv[:, 2 * E + lo:2 * E + lo + hd]    # (S, hd)

        # scores = q @ k^T (contract on last dims; no explicit transpose relayout).
        s = lax.dot_general(qh, kh, (((1,), (1,)), ((), ())),
                            preferred_element_type=jnp.float32)             # (S, S)
        s = s - jnp.max(s, axis=-1, keepdims=True)
        p = jnp.exp(s)
        # Exact reciprocal (still on the EUP slot); approx=True broke correctness before.
        p = p * pl.reciprocal(jnp.sum(p, axis=-1, keepdims=True), approx=False)

        ctx_h = jnp.dot(p, vh, preferred_element_type=jnp.float32)          # (S, hd)
        # Per-head output projection accumulated; woT row slice is sublane-aligned.
        acc = acc + jnp.dot(ctx_h, woT[lo:lo + hd, :],
                            preferred_element_type=jnp.float32)             # (S, E)

    o_ref[0] = acc.astype(o_ref.dtype)


def sinusoidal_positional_encodings(max_length, embed_dim):
    """Matches VideoEmbeddingModel._generate_positional_encodings (returns (max_len, E))."""
    position = jnp.arange(0, max_length, dtype=jnp.float32)[:, None]            # (L, 1)
    div_term = jnp.exp(jnp.arange(0, embed_dim, 2, dtype=jnp.float32)
                       * -(math.log(10000.0) / embed_dim))                      # (E/2,)
    args = position * div_term                                                   # (L, E/2)
    pe = jnp.zeros((max_length, embed_dim), dtype=jnp.float32)
    pe = pe.at[:, 0::2].set(jnp.sin(args))
    pe = pe.at[:, 1::2].set(jnp.cos(args))
    return pe


def pack_params(params, num_heads):
    """ONE-TIME host-side packing (called at init, not per forward call).

    PyTorch layout is (out, in) with y = x @ W.T + b: pre-transpose so the kernel
    never transposes weights, fuse Q/K/V into one (E, 3E) matrix, and fold the
    1/sqrt(head_dim) softmax scale into the Q columns and Q bias.
    """
    E = params["wq"].shape[0]
    hd = E // num_heads
    scale = 1.0 / math.sqrt(hd)
    wqkvT = jnp.concatenate(
        [params["wq"].T * scale, params["wk"].T, params["wv"].T], axis=1)        # (E, 3E)
    bqkv = jnp.concatenate(
        [params["bq"] * scale, params["bk"], params["bv"]]).reshape(1, 3 * E)    # (1, 3E)
    return dict(
        wqkvT=wqkvT,
        bqkv=bqkv,
        woT=params["wo"].T,                                                      # (E, E)
        bo=params["bo"].reshape(1, E),                                           # (1, E)
        pe=params["pe"],                                                         # (L, E)
    )


def video_embedding_forward(video_frames, packed, num_heads):
    """video_frames: (B, S, E) float32.  Returns (B, S, E)."""
    B, S, E = video_frames.shape
    assert E % num_heads == 0, "embed_dim must be divisible by num_heads"
    assert S <= packed["pe"].shape[0], "sequence longer than max_sequence_length"

    pe = packed["pe"][:S]                                                        # (S, E)

    kernel = functools.partial(_video_embed_kernel, num_heads=num_heads)

    return pl.pallas_call(
        kernel,
        out_shape=jax.ShapeDtypeStruct((B, S, E), video_frames.dtype),
        grid=(B,),
        in_specs=[
            pl.BlockSpec((1, S, E), lambda b: (b, 0, 0)),       # x: one batch per step
            pl.BlockSpec((S, E), lambda b: (0, 0)),             # positional encodings (shared)
            pl.BlockSpec((E, 3 * E), lambda b: (0, 0)),         # packed QKV weight
            pl.BlockSpec((1, 3 * E), lambda b: (0, 0)),         # packed QKV bias
            pl.BlockSpec((E, E), lambda b: (0, 0)),             # out-proj weight (pre-T)
            pl.BlockSpec((1, E), lambda b: (0, 0)),             # out-proj bias
        ],
        out_specs=pl.BlockSpec((1, S, E), lambda b: (b, 0, 0)),
        compiler_params=pltpu.CompilerParams(
            dimension_semantics=("parallel",)),                 # shards batch over v7x's 2 TCs
    )(video_frames, pe, packed["wqkvT"], packed["bqkv"], packed["woT"], packed["bo"])


def reference_forward(x, params, num_heads):
    """Pure-JAX reference mirroring PyTorch nn.MultiheadAttention semantics (f32 HIGHEST)."""
    B, S, E = x.shape
    hd = E // num_heads
    hp = lax.Precision.HIGHEST
    pe = params["pe"][:S]
    xb = x + pe[None]
    q = jnp.matmul(xb, params["wq"].T, precision=hp) + params["bq"]
    k = jnp.matmul(xb, params["wk"].T, precision=hp) + params["bk"]
    v = jnp.matmul(xb, params["wv"].T, precision=hp) + params["bv"]

    def split(t):  # (B, S, E) -> (B, H, S, hd)
        return t.reshape(B, S, num_heads, hd).transpose(0, 2, 1, 3)

    qh, kh, vh = split(q), split(k), split(v)
    scores = jnp.einsum("bhqd,bhkd->bhqk", qh, kh, precision=hp) / math.sqrt(hd)
    p = jax.nn.softmax(scores, axis=-1)
    ctx = jnp.einsum("bhqk,bhkd->bhqd", p, vh, precision=hp)
    ctx = ctx.transpose(0, 2, 1, 3).reshape(B, S, E)
    return jnp.matmul(ctx, params["wo"].T, precision=hp) + params["bo"]


def init_params(key, embed_dim, max_sequence_length):
    """Deterministic synthetic parameters (shapes match nn.MultiheadAttention)."""
    ks = jax.random.split(key, 8)
    scale = 1.0 / math.sqrt(embed_dim)
    wq = jax.random.normal(ks[0], (embed_dim, embed_dim), jnp.float32) * scale
    wk = jax.random.normal(ks[1], (embed_dim, embed_dim), jnp.float32) * scale
    wv = jax.random.normal(ks[2], (embed_dim, embed_dim), jnp.float32) * scale
    wo = jax.random.normal(ks[3], (embed_dim, embed_dim), jnp.float32) * scale
    bq = jax.random.normal(ks[4], (embed_dim,), jnp.float32) * 0.01
    bk = jax.random.normal(ks[5], (embed_dim,), jnp.float32) * 0.01
    bv = jax.random.normal(ks[6], (embed_dim,), jnp.float32) * 0.01
    bo = jax.random.normal(ks[7], (embed_dim,), jnp.float32) * 0.01
    pe = sinusoidal_positional_encodings(max_sequence_length, embed_dim)
    return dict(wq=wq, wk=wk, wv=wv, wo=wo, bq=bq, bk=bk, bv=bv, bo=bo, pe=pe)


if __name__ == "__main__":
    embed_dim = 32
    num_heads = 4
    max_sequence_length = 16
    batch = 2
    seq = 8

    key = jax.random.PRNGKey(0)
    k_x, k_p = jax.random.split(key)
    video_frames = jax.random.normal(k_x, (batch, seq, embed_dim), jnp.float32)
    params = init_params(k_p, embed_dim, max_sequence_length)
    packed = pack_params(params, num_heads)        # one-time packing (not per forward)

    out = video_embedding_forward(video_frames, packed, num_heads)
    out = jax.block_until_ready(out)

    ref = reference_forward(video_frames, params, num_heads)
    ref = jax.block_until_ready(ref)

    assert out.shape == (batch, seq, embed_dim)
    # Tolerance covers the kernel's default TPU f32-matmul precision vs. the
    # HIGHEST-precision reference; structural/semantic errors would be O(0.1-1).
    assert jnp.allclose(out, ref, rtol=2e-2, atol=2e-2), (
        "Pallas output mismatch vs reference: max abs diff = "
        f"{float(jnp.max(jnp.abs(out - ref)))}")

    print("KERNEL_OK")
</pallas_src>

<mosaic_0001>
module attributes {stable_mosaic.version = 11 : i64} {
  func.func @_video_embed_kernel(%arg0: i32, %arg1: memref<1x8x32xf32, #tpu.memory_space<vmem>>, %arg2: memref<8x32xf32, #tpu.memory_space<vmem>>, %arg3: memref<32x96xf32, #tpu.memory_space<vmem>>, %arg4: memref<1x96xf32, #tpu.memory_space<vmem>>, %arg5: memref<32x32xf32, #tpu.memory_space<vmem>>, %arg6: memref<1x32xf32, #tpu.memory_space<vmem>>, %arg7: memref<1x8x32xf32, #tpu.memory_space<vmem>>) attributes {dimension_semantics = [#tpu.dimension_semantics<parallel>], iteration_bounds = array<i64: 2>, scalar_prefetch = 0 : i64, scratch_operands = 0 : i64, tpu.core_type = #tpu.core_type<tc>, window_params = [{transform_indices = @transform_0, window_bounds = array<i64: 1, 8, 32>}, {pipeline_mode = #tpu.pipeline_mode<synchronous>, transform_indices = @transform_1, window_bounds = array<i64: 8, 32>}, {pipeline_mode = #tpu.pipeline_mode<synchronous>, transform_indices = @transform_2, window_bounds = array<i64: 32, 96>}, {pipeline_mode = #tpu.pipeline_mode<synchronous>, transform_indices = @transform_3, window_bounds = array<i64: 1, 96>}, {pipeline_mode = #tpu.pipeline_mode<synchronous>, transform_indices = @transform_4, window_bounds = array<i64: 32, 32>}, {pipeline_mode = #tpu.pipeline_mode<synchronous>, transform_indices = @transform_5, window_bounds = array<i64: 1, 32>}, {transform_indices = @transform_6, window_bounds = array<i64: 1, 8, 32>}]} {
    %c0 = arith.constant 0 : index
    %c0_0 = arith.constant 0 : index
    %0 = vector.load %arg2[%c0, %c0_0] : memref<8x32xf32, #tpu.memory_space<vmem>>, vector<8x32xf32>
    %c0_1 = arith.constant 0 : index
    %c0_2 = arith.constant 0 : index
    %1 = vector.load %arg3[%c0_1, %c0_2] : memref<32x96xf32, #tpu.memory_space<vmem>>, vector<32x96xf32>
    %c0_3 = arith.constant 0 : index
    %c0_4 = arith.constant 0 : index
    %2 = vector.load %arg4[%c0_3, %c0_4] : memref<1x96xf32, #tpu.memory_space<vmem>>, vector<1x96xf32>
    %c0_5 = arith.constant 0 : index
    %c0_6 = arith.constant 0 : index
    %3 = vector.load %arg5[%c0_5, %c0_6] : memref<32x32xf32, #tpu.memory_space<vmem>>, vector<32x32xf32>
    %c0_7 = arith.constant 0 : index
    %c0_8 = arith.constant 0 : index
    %4 = vector.load %arg6[%c0_7, %c0_8] : memref<1x32xf32, #tpu.memory_space<vmem>>, vector<1x32xf32>
    %c0_9 = arith.constant 0 : index
    %c0_10 = arith.constant 0 : index
    %c0_11 = arith.constant 0 : index
    %5 = vector.load %arg1[%c0_9, %c0_10, %c0_11] : memref<1x8x32xf32, #tpu.memory_space<vmem>>, vector<1x8x32xf32>
    %6 = vector.shape_cast %5 : vector<1x8x32xf32> to vector<8x32xf32>
    %7 = arith.addf %6, %0 : vector<8x32xf32>
    %cst = arith.constant dense<0.000000e+00> : vector<8x96xf32>
    %8 = tpu.matmul %7, %1, %cst {dimension_numbers = #tpu.dot_dimension_numbers<[1], [0], [0], [1], [0, 0, 1, 1], [], []>} : vector<8x32xf32>, vector<32x96xf32>, vector<8x96xf32> -> vector<8x96xf32>
    %9 = vector.broadcast %2 : vector<1x96xf32> to vector<8x96xf32>
    %10 = arith.addf %8, %9 : vector<8x96xf32>
    %11 = vector.shape_cast %4 : vector<1x32xf32> to vector<1x32xf32>
    %12 = vector.broadcast %11 : vector<1x32xf32> to vector<8x32xf32>
    %13 = vector.extract_strided_slice %10 {offsets = [0, 0], sizes = [8, 8], strides = [1, 1]} : vector<8x96xf32> to vector<8x8xf32>
    %14 = vector.extract_strided_slice %10 {offsets = [0, 32], sizes = [8, 8], strides = [1, 1]} : vector<8x96xf32> to vector<8x8xf32>
    %15 = vector.extract_strided_slice %10 {offsets = [0, 64], sizes = [8, 8], strides = [1, 1]} : vector<8x96xf32> to vector<8x8xf32>
    %cst_12 = arith.constant dense<0.000000e+00> : vector<8x8xf32>
    %16 = tpu.matmul %13, %14, %cst_12 {dimension_numbers = #tpu.dot_dimension_numbers<[1], [1], [0], [0], [0, 0, 1, 0], [], []>} : vector<8x8xf32>, vector<8x8xf32>, vector<8x8xf32> -> vector<8x8xf32>
    %cst_13 = arith.constant dense<0xFF800000> : vector<8xf32>
    %17 = vector.multi_reduction <maximumf>, %16, %cst_13 [1] : vector<8x8xf32> to vector<8xf32>
    %18 = vector.shape_cast %17 : vector<8xf32> to vector<8x1xf32>
    %19 = vector.broadcast %18 : vector<8x1xf32> to vector<8x8xf32>
    %20 = arith.subf %16, %19 : vector<8x8xf32>
    %21 = math.exp %20 : vector<8x8xf32>
    %cst_14 = arith.constant dense<0.000000e+00> : vector<8xf32>
    %22 = vector.multi_reduction <add>, %21, %cst_14 [1] : vector<8x8xf32> to vector<8xf32>
    %23 = vector.shape_cast %22 : vector<8xf32> to vector<8x1xf32>
    %24 = tpu.reciprocal %23 : vector<8x1xf32> -> vector<8x1xf32>
    %25 = vector.broadcast %24 : vector<8x1xf32> to vector<8x8xf32>
    %26 = arith.mulf %21, %25 : vector<8x8xf32>
    %cst_15 = arith.constant dense<0.000000e+00> : vector<8x8xf32>
    %27 = tpu.matmul %26, %15, %cst_15 {dimension_numbers = #tpu.dot_dimension_numbers<[1], [0], [0], [1], [0, 0, 1, 1], [], []>} : vector<8x8xf32>, vector<8x8xf32>, vector<8x8xf32> -> vector<8x8xf32>
    %28 = vector.extract_strided_slice %3 {offsets = [0, 0], sizes = [8, 32], strides = [1, 1]} : vector<32x32xf32> to vector<8x32xf32>
    %cst_16 = arith.constant dense<0.000000e+00> : vector<8x32xf32>
    %29 = tpu.matmul %27, %28, %cst_16 {dimension_numbers = #tpu.dot_dimension_numbers<[1], [0], [0], [1], [0, 0, 1, 1], [], []>} : vector<8x8xf32>, vector<8x32xf32>, vector<8x32xf32> -> vector<8x32xf32>
    %30 = arith.addf %12, %29 : vector<8x32xf32>
    %31 = vector.extract_strided_slice %10 {offsets = [0, 8], sizes = [8, 8], strides = [1, 1]} : vector<8x96xf32> to vector<8x8xf32>
    %32 = vector.extract_strided_slice %10 {offsets = [0, 40], sizes = [8, 8], strides = [1, 1]} : vector<8x96xf32> to vector<8x8xf32>
    %33 = vector.extract_strided_slice %10 {offsets = [0, 72], sizes = [8, 8], strides = [1, 1]} : vector<8x96xf32> to vector<8x8xf32>
    %cst_17 = arith.constant dense<0.000000e+00> : vector<8x8xf32>
    %34 = tpu.matmul %31, %32, %cst_17 {dimension_numbers = #tpu.dot_dimension_numbers<[1], [1], [0], [0], [0, 0, 1, 0], [], []>} : vector<8x8xf32>, vector<8x8xf32>, vector<8x8xf32> -> vector<8x8xf32>
    %cst_18 = arith.constant dense<0xFF800000> : vector<8xf32>
    %35 = vector.multi_reduction <maximumf>, %34, %cst_18 [1] : vector<8x8xf32> to vector<8xf32>
    %36 = vector.shape_cast %35 : vector<8xf32> to vector<8x1xf32>
    %37 = vector.broadcast %36 : vector<8x1xf32> to vector<8x8xf32>
    %38 = arith.subf %34, %37 : vector<8x8xf32>
    %39 = math.exp %38 : vector<8x8xf32>
    %cst_19 = arith.constant dense<0.000000e+00> : vector<8xf32>
    %40 = vector.multi_reduction <add>, %39, %cst_19 [1] : vector<8x8xf32> to vector<8xf32>
    %41 = vector.shape_cast %40 : vector<8xf32> to vector<8x1xf32>
    %42 = tpu.reciprocal %41 : vector<8x1xf32> -> vector<8x1xf32>
    %43 = vector.broadcast %42 : vector<8x1xf32> to vector<8x8xf32>
    %44 = arith.mulf %39, %43 : vector<8x8xf32>
    %cst_20 = arith.constant dense<0.000000e+00> : vector<8x8xf32>
    %45 = tpu.matmul %44, %33, %cst_20 {dimension_numbers = #tpu.dot_dimension_numbers<[1], [0], [0], [1], [0, 0, 1, 1], [], []>} : vector<8x8xf32>, vector<8x8xf32>, vector<8x8xf32> -> vector<8x8xf32>
    %46 = vector.extract_strided_slice %3 {offsets = [8, 0], sizes = [8, 32], strides = [1, 1]} : vector<32x32xf32> to vector<8x32xf32>
    %cst_21 = arith.constant dense<0.000000e+00> : vector<8x32xf32>
    %47 = tpu.matmul %45, %46, %cst_21 {dimension_numbers = #tpu.dot_dimension_numbers<[1], [0], [0], [1], [0, 0, 1, 1], [], []>} : vector<8x8xf32>, vector<8x32xf32>, vector<8x32xf32> -> vector<8x32xf32>
    %48 = arith.addf %30, %47 : vector<8x32xf32>
    %49 = vector.extract_strided_slice %10 {offsets = [0, 16], sizes = [8, 8], strides = [1, 1]} : vector<8x96xf32> to vector<8x8xf32>
    %50 = vector.extract_strided_slice %10 {offsets = [0, 48], sizes = [8, 8], strides = [1, 1]} : vector<8x96xf32> to vector<8x8xf32>
    %51 = vector.extract_strided_slice %10 {offsets = [0, 80], sizes = [8, 8], strides = [1, 1]} : vector<8x96xf32> to vector<8x8xf32>
    %cst_22 = arith.constant dense<0.000000e+00> : vector<8x8xf32>
    %52 = tpu.matmul %49, %50, %cst_22 {dimension_numbers = #tpu.dot_dimension_numbers<[1], [1], [0], [0], [0, 0, 1, 0], [], []>} : vector<8x8xf32>, vector<8x8xf32>, vector<8x8xf32> -> vector<8x8xf32>
    %cst_23 = arith.constant dense<0xFF800000> : vector<8xf32>
    %53 = vector.multi_reduction <maximumf>, %52, %cst_23 [1] : vector<8x8xf32> to vector<8xf32>
    %54 = vector.shape_cast %53 : vector<8xf32> to vector<8x1xf32>
    %55 = vector.broadcast %54 : vector<8x1xf32> to vector<8x8xf32>
    %56 = arith.subf %52, %55 : vector<8x8xf32>
    %57 = math.exp %56 : vector<8x8xf32>
    %cst_24 = arith.constant dense<0.000000e+00> : vector<8xf32>
    %58 = vector.multi_reduction <add>, %57, %cst_24 [1] : vector<8x8xf32> to vector<8xf32>
    %59 = vector.shape_cast %58 : vector<8xf32> to vector<8x1xf32>
    %60 = tpu.reciprocal %59 : vector<8x1xf32> -> vector<8x1xf32>
    %61 = vector.broadcast %60 : vector<8x1xf32> to vector<8x8xf32>
    %62 = arith.mulf %57, %61 : vector<8x8xf32>
    %cst_25 = arith.constant dense<0.000000e+00> : vector<8x8xf32>
    %63 = tpu.matmul %62, %51, %cst_25 {dimension_numbers = #tpu.dot_dimension_numbers<[1], [0], [0], [1], [0, 0, 1, 1], [], []>} : vector<8x8xf32>, vector<8x8xf32>, vector<8x8xf32> -> vector<8x8xf32>
    %64 = vector.extract_strided_slice %3 {offsets = [16, 0], sizes = [8, 32], strides = [1, 1]} : vector<32x32xf32> to vector<8x32xf32>
    %cst_26 = arith.constant dense<0.000000e+00> : vector<8x32xf32>
    %65 = tpu.matmul %63, %64, %cst_26 {dimension_numbers = #tpu.dot_dimension_numbers<[1], [0], [0], [1], [0, 0, 1, 1], [], []>} : vector<8x8xf32>, vector<8x32xf32>, vector<8x32xf32> -> vector<8x32xf32>
    %66 = arith.addf %48, %65 : vector<8x32xf32>
    %67 = vector.extract_strided_slice %10 {offsets = [0, 24], sizes = [8, 8], strides = [1, 1]} : vector<8x96xf32> to vector<8x8xf32>
    %68 = vector.extract_strided_slice %10 {offsets = [0, 56], sizes = [8, 8], strides = [1, 1]} : vector<8x96xf32> to vector<8x8xf32>
    %69 = vector.extract_strided_slice %10 {offsets = [0, 88], sizes = [8, 8], strides = [1, 1]} : vector<8x96xf32> to vector<8x8xf32>
    %cst_27 = arith.constant dense<0.000000e+00> : vector<8x8xf32>
    %70 = tpu.matmul %67, %68, %cst_27 {dimension_numbers = #tpu.dot_dimension_numbers<[1], [1], [0], [0], [0, 0, 1, 0], [], []>} : vector<8x8xf32>, vector<8x8xf32>, vector<8x8xf32> -> vector<8x8xf32>
    %cst_28 = arith.constant dense<0xFF800000> : vector<8xf32>
    %71 = vector.multi_reduction <maximumf>, %70, %cst_28 [1] : vector<8x8xf32> to vector<8xf32>
    %72 = vector.shape_cast %71 : vector<8xf32> to vector<8x1xf32>
    %73 = vector.broadcast %72 : vector<8x1xf32> to vector<8x8xf32>
    %74 = arith.subf %70, %73 : vector<8x8xf32>
    %75 = math.exp %74 : vector<8x8xf32>
    %cst_29 = arith.constant dense<0.000000e+00> : vector<8xf32>
    %76 = vector.multi_reduction <add>, %75, %cst_29 [1] : vector<8x8xf32> to vector<8xf32>
    %77 = vector.shape_cast %76 : vector<8xf32> to vector<8x1xf32>
    %78 = tpu.reciprocal %77 : vector<8x1xf32> -> vector<8x1xf32>
    %79 = vector.broadcast %78 : vector<8x1xf32> to vector<8x8xf32>
    %80 = arith.mulf %75, %79 : vector<8x8xf32>
    %cst_30 = arith.constant dense<0.000000e+00> : vector<8x8xf32>
    %81 = tpu.matmul %80, %69, %cst_30 {dimension_numbers = #tpu.dot_dimension_numbers<[1], [0], [0], [1], [0, 0, 1, 1], [], []>} : vector<8x8xf32>, vector<8x8xf32>, vector<8x8xf32> -> vector<8x8xf32>
    %82 = vector.extract_strided_slice %3 {offsets = [24, 0], sizes = [8, 32], strides = [1, 1]} : vector<32x32xf32> to vector<8x32xf32>
    %cst_31 = arith.constant dense<0.000000e+00> : vector<8x32xf32>
    %83 = tpu.matmul %81, %82, %cst_31 {dimension_numbers = #tpu.dot_dimension_numbers<[1], [0], [0], [1], [0, 0, 1, 1], [], []>} : vector<8x8xf32>, vector<8x32xf32>, vector<8x32xf32> -> vector<8x32xf32>
    %84 = arith.addf %66, %83 : vector<8x32xf32>
    %c0_32 = arith.constant 0 : index
    %c0_33 = arith.constant 0 : index
    %c0_34 = arith.constant 0 : index
    %85 = vector.load %arg7[%c0_32, %c0_33, %c0_34] : memref<1x8x32xf32, #tpu.memory_space<vmem>>, vector<1x8x32xf32>
    %86 = vector.shape_cast %85 : vector<1x8x32xf32> to vector<8x32xf32>
    %87 = vector.shape_cast %84 : vector<8x32xf32> to vector<1x8x32xf32>
    tpu.vector_store %arg7[%c0_32, %c0_33, %c0_34], %87 {strides = array<i32>} : memref<1x8x32xf32, #tpu.memory_space<vmem>>, vector<1x8x32xf32>,
    return
  }
  func.func @transform_0(%arg0: i32) -> (i32, i32, i32) {
    %c0_i32 = arith.constant 0 : i32
    %c0_i32_0 = arith.constant 0 : i32
    %c0_i32_1 = arith.constant 0 : i32
    return %arg0, %c0_i32, %c0_i32_0 : i32, i32, i32
  }
  func.func @transform_1(%arg0: i32) -> (i32, i32) {
    %c0_i32 = arith.constant 0 : i32
    %c0_i32_0 = arith.constant 0 : i32
    %c0_i32_1 = arith.constant 0 : i32
    return %c0_i32, %c0_i32_0 : i32, i32
  }
  func.func @transform_2(%arg0: i32) -> (i32, i32) {
    %c0_i32 = arith.constant 0 : i32
    %c0_i32_0 = arith.constant 0 : i32
    %c0_i32_1 = arith.constant 0 : i32
    return %c0_i32, %c0_i32_0 : i32, i32
  }
  func.func @transform_3(%arg0: i32) -> (i32, i32) {
    %c0_i32 = arith.constant 0 : i32
    %c0_i32_0 = arith.constant 0 : i32
    %c0_i32_1 = arith.constant 0 : i32
    return %c0_i32, %c0_i32_0 : i32, i32
  }
  func.func @transform_4(%arg0: i32) -> (i32, i32) {
    %c0_i32 = arith.constant 0 : i32
    %c0_i32_0 = arith.constant 0 : i32
    %c0_i32_1 = arith.constant 0 : i32
    return %c0_i32, %c0_i32_0 : i32, i32
  }
  func.func @transform_5(%arg0: i32) -> (i32, i32) {
    %c0_i32 = arith.constant 0 : i32
    %c0_i32_0 = arith.constant 0 : i32
    %c0_i32_1 = arith.constant 0 : i32
    return %c0_i32, %c0_i32_0 : i32, i32
  }
  func.func @transform_6(%arg0: i32) -> (i32, i32, i32) {
    %c0_i32 = arith.constant 0 : i32
    %c0_i32_0 = arith.constant 0 : i32
    %c0_i32_1 = arith.constant 0 : i32
    return %arg0, %c0_i32, %c0_i32_0 : i32, i32, i32
  }
}

</mosaic_0001>

<llo_original>
// kernel: tpu_custom_call.1
$region0: #{tpu_custom_call.1}
  #allocation0 [shape = 'u32[]', space=smem, size = 0x4, offset = 0x4, fixed_abs, tag = 'smem constant byte address 0x4 - core index']
  #allocation1 [shape = 'u32[144,128]{1,0:T(1,128)}', space=vmem, size = 0x12000, scoped, tag = 'internal scratch']
  %s0 = inlined_call_operand.hbm [shape: f32[2,8,32], index: 0, kind: input, shape index: {}]
  %s1 = inlined_call_operand.hbm [shape: f32[8,32], index: 1, kind: input, shape index: {}]
  %s2 = inlined_call_operand.hbm [shape: f32[32,96], index: 2, kind: input, shape index: {}]
  %s3 = inlined_call_operand.vmem [shape: f32[1,96], index: 3, kind: input, shape index: {}]
  %s4 = inlined_call_operand.hbm [shape: f32[32,32], index: 4, kind: input, shape index: {}]
  %s5 = inlined_call_operand.vmem [shape: f32[1,32], index: 5, kind: input, shape index: {}]
  %s6 = inlined_call_operand.hbm [shape: f32[2,8,32], index: 6, kind: output, shape index: {}]
  %s7 = sld [smem:[#allocation0]]
  $region73: #{tpu_custom_call.1} parent=0
    _
  %s9 = ssub.s32 1, %s7
  %s10 = scalar_select 0, %s9, %s7
  $region1: #{tpu_custom_call.1} parent=0
    #allocation2 [shape = 'u8[8192]{0}', space=vmem, size = 0x2000, scoped, tag = 'input window, operand 0']
    #allocation3 [shape = 's32[2]{0}', space=sflag, size = 0x8, scoped, tag = 'scoped memory for tpu_custom_call.1']
    #allocation4 [shape = 's32[2]{0}', space=sflag, size = 0x8, scoped, tag = 'scoped memory for tpu_custom_call.1']
    #allocation5 [shape = 'u8[4096]{0}', space=vmem, size = 0x1000, scoped, tag = 'input window, operand 1, single buffered']
    #allocation6 [shape = 's32[1]{0}', space=sflag, size = 0x4, scoped, tag = 'scoped memory for tpu_custom_call.1']
    #allocation7 [shape = 'u8[16384]{0}', space=vmem, size = 0x4000, scoped, tag = 'input window, operand 2, single buffered']
    #allocation8 [shape = 'u8[16384]{0}', space=vmem, size = 0x4000, scoped, tag = 'input window, operand 4, single buffered']
    #allocation9 [shape = 's32[1]{0}', space=sflag, size = 0x4, scoped, tag = 'scoped memory for tpu_custom_call.1']
    #allocation10 [shape = 'u8[8192]{0}', space=vmem, size = 0x2000, scoped, tag = 'output window, operand 0']
    %11 = vsyncpa [#allocation3], 0
    %s12 = scalar_lea.sflag [#allocation3], 1
    %13 = vsyncpa %s12, 0
    %14 = vsyncpa [#allocation6], 0
    %15 = vsyncpa [#allocation9], 0
    %16 = vsyncpa [#allocation4], 0
    %s17 = scalar_lea.sflag [#allocation4], 1
    %18 = vsyncpa %s17, 0
    loop: start=0, step=1, limit=4
    $region2: #{tpu_custom_call.1} parent=1 // loop_pre_header
      _
    $region3: #{tpu_custom_call.1} parent=1 // loop_header
      %s20 = sphi 0, %s24
      %p21 = scmp.ge.s32.totalorder %s20, 4
      %s30 = sphi 0, %s32
      %s33 = sphi 0, %s30
      %s34 = sphi 0, %s33
      %s50 = sphi 0, %s34
      %s54 = sphi 0, %s54
      %s56 = sphi 0, %s54
      %s57 = sphi 0, %s56
      %s71 = sphi 0, %s57
      %s75 = sphi 0, %s75
      %s77 = sphi 0, %s75
      %s78 = sphi 0, %s77
      %s92 = sphi 0, %s78
      %s96 = sphi 0, %s96
      %s98 = sphi 0, %s96
      %s99 = sphi 0, %s98
      %s113 = sphi 0, %s99
      %s117 = sphi 0, %s117
      %s119 = sphi 0, %s117
      %s120 = sphi 0, %s119
      %s134 = sphi 0, %s120
      %s138 = sphi 0, %s138
      %s140 = sphi 0, %s138
      %s141 = sphi 0, %s140
      %s155 = sphi 0, %s141
      %s161 = sphi 0, %s163
      %s164 = sphi 0, %s161
      %s165 = sphi 0, %s164
      %s181 = sphi 0, %s165
    $region4: #{tpu_custom_call.1} parent=1 // loop_header_branch
      %23 = sbr.rel (%p21) target = $region8
    $region5: #{tpu_custom_call.1} parent=1 // loop_body
      %s25 = ssub.s32 %s20, 1
      %s26 = ssub.s32 %s20, 2
      %s27 = sadd.s32 %s20, 1
      %s28 = ssub.s32 %s20, %s27
      %p29 = scmp.eq.s32.totalorder %s28, 0
      %s31 = sadd.s32 %s30, 1
      %s32 = scalar_select %p29, %s30, %s31
      %p35 = pneg %p29
      %p36 = scmp.eq.s32.totalorder %s20, 1
      %p37 = por %p35, %p36
      %p38 = scmp.ne.s32.totalorder %s30, %s33
      %p39 = scmp.eq.s32.totalorder %s20, 0
      %p40 = por %p38, %p39
      %p41 = scmp.ne.s32.totalorder %s30, %s33
      %p42 = scmp.eq.s32.totalorder %s25, 1
      %p43 = por %p41, %p42
      %p44 = scmp.ne.s32.totalorder %s33, %s34
      %p45 = scmp.eq.s32.totalorder %s25, 0
      %p46 = por %p44, %p45
      %p47 = scmp.ne.s32.totalorder %s33, %s34
      %p48 = scmp.eq.s32.totalorder %s26, 1
      %p49 = por %p47, %p48
      %p51 = scmp.ne.s32.totalorder %s34, %s50
      %p52 = scmp.eq.s32.totalorder %s26, 0
      %p53 = por %p51, %p52
      %s55 = sadd.s32 %s54, 1
      %p58 = scmp.eq.s32.totalorder %s20, 1
      %p59 = scmp.ne.s32.totalorder %s54, %s56
      %p60 = scmp.eq.s32.totalorder %s20, 0
      %p61 = por %p59, %p60
      %p62 = scmp.ne.s32.totalorder %s54, %s56
      %p63 = scmp.eq.s32.totalorder %s25, 1
      %p64 = por %p62, %p63
      %p65 = scmp.ne.s32.totalorder %s56, %s57
      %p66 = scmp.eq.s32.totalorder %s25, 0
      %p67 = por %p65, %p66
      %p68 = scmp.ne.s32.totalorder %s56, %s57
      %p69 = scmp.eq.s32.totalorder %s26, 1
      %p70 = por %p68, %p69
      %p72 = scmp.ne.s32.totalorder %s57, %s71
      %p73 = scmp.eq.s32.totalorder %s26, 0
      %p74 = por %p72, %p73
      %s76 = sadd.s32 %s75, 1
      %p79 = scmp.eq.s32.totalorder %s20, 1
      %p80 = scmp.ne.s32.totalorder %s75, %s77
      %p81 = scmp.eq.s32.totalorder %s20, 0
      %p82 = por %p80, %p81
      %p83 = scmp.ne.s32.totalorder %s75, %s77
      %p84 = scmp.eq.s32.totalorder %s25, 1
      %p85 = por %p83, %p84
      %p86 = scmp.ne.s32.totalorder %s77, %s78
      %p87 = scmp.eq.s32.totalorder %s25, 0
      %p88 = por %p86, %p87
      %p89 = scmp.ne.s32.totalorder %s77, %s78
      %p90 = scmp.eq.s32.totalorder %s26, 1
      %p91 = por %p89, %p90
      %p93 = scmp.ne.s32.totalorder %s78, %s92
      %p94 = scmp.eq.s32.totalorder %s26, 0
      %p95 = por %p93, %p94
      %s97 = sadd.s32 %s96, 1
      %p100 = scmp.eq.s32.totalorder %s20, 1
      %p101 = scmp.ne.s32.totalorder %s96, %s98
      %p102 = scmp.eq.s32.totalorder %s20, 0
      %p103 = por %p101, %p102
      %p104 = scmp.ne.s32.totalorder %s96, %s98
      %p105 = scmp.eq.s32.totalorder %s25, 1
      %p106 = por %p104, %p105
      %p107 = scmp.ne.s32.totalorder %s98, %s99
      %p108 = scmp.eq.s32.totalorder %s25, 0
      %p109 = por %p107, %p108
      %p110 = scmp.ne.s32.totalorder %s98, %s99
      %p111 = scmp.eq.s32.totalorder %s26, 1
      %p112 = por %p110, %p111
      %p114 = scmp.ne.s32.totalorder %s99, %s113
      %p115 = scmp.eq.s32.totalorder %s26, 0
      %p116 = por %p114, %p115
      %s118 = sadd.s32 %s117, 1
      %p121 = scmp.eq.s32.totalorder %s20, 1
      %p122 = scmp.ne.s32.totalorder %s117, %s119
      %p123 = scmp.eq.s32.totalorder %s20, 0
      %p124 = por %p122, %p123
      %p125 = scmp.ne.s32.totalorder %s117, %s119
      %p126 = scmp.eq.s32.totalorder %s25, 1
      %p127 = por %p125, %p126
      %p128 = scmp.ne.s32.totalorder %s119, %s120
      %p129 = scmp.eq.s32.totalorder %s25, 0
      %p130 = por %p128, %p129
      %p131 = scmp.ne.s32.totalorder %s119, %s120
      %p132 = scmp.eq.s32.totalorder %s26, 1
      %p133 = por %p131, %p132
      %p135 = scmp.ne.s32.totalorder %s120, %s134
      %p136 = scmp.eq.s32.totalorder %s26, 0
      %p137 = por %p135, %p136
      %s139 = sadd.s32 %s138, 1
      %p142 = scmp.eq.s32.totalorder %s20, 1
      %p143 = scmp.ne.s32.totalorder %s138, %s140
      %p144 = scmp.eq.s32.totalorder %s20, 0
      %p145 = por %p143, %p144
      %p146 = scmp.ne.s32.totalorder %s138, %s140
      %p147 = scmp.eq.s32.totalorder %s25, 1
      %p148 = por %p146, %p147
      %p149 = scmp.ne.s32.totalorder %s140, %s141
      %p150 = scmp.eq.s32.totalorder %s25, 0
      %p151 = por %p149, %p150
      %p152 = scmp.ne.s32.totalorder %s140, %s141
      %p153 = scmp.eq.s32.totalorder %s26, 1
      %p154 = por %p152, %p153
      %p156 = scmp.ne.s32.totalorder %s141, %s155
      %p157 = scmp.eq.s32.totalorder %s26, 0
      %p158 = por %p156, %p157
      %s159 = ssub.s32 %s20, %s27
      %p160 = scmp.eq.s32.totalorder %s159, 0
      %s162 = sadd.s32 %s161, 1
      %s163 = scalar_select %p160, %s161, %s162
      %p166 = pneg %p160
      %p167 = scmp.eq.s32.totalorder %s20, 1
      %p168 = por %p166, %p167
      %p169 = scmp.ne.s32.totalorder %s161, %s164
      %p170 = scmp.eq.s32.totalorder %s20, 0
      %p171 = por %p169, %p170
      %p172 = scmp.ne.s32.totalorder %s161, %s164
      %p173 = scmp.eq.s32.totalorder %s25, 1
      %p174 = por %p172, %p173
      %p175 = scmp.ne.s32.totalorder %s164, %s165
      %p176 = scmp.eq.s32.totalorder %s25, 0
      %p177 = por %p175, %p176
      %p178 = scmp.ne.s32.totalorder %s164, %s165
      %p179 = scmp.eq.s32.totalorder %s26, 1
      %p180 = por %p178, %p179
      %p182 = scmp.ne.s32.totalorder %s165, %s181
      %p183 = scmp.eq.s32.totalorder %s26, 0
      %p184 = por %p182, %p183
      %p185 = scmp.le.s32.totalorder 1, %s20
      %p186 = scmp.lt.s32.totalorder %s20, 3
      %p187 = pnand %p185, %p186
      %p188 = pneg %p187
      // Predicated region
      $region9: #{tpu_custom_call.1} parent=5 // pred_check
        _
      $region10: #{tpu_custom_call.1} parent=5 // pred_check_branch
        %190 = sbr.rel (%p187) target = $region12
      $region11: #{tpu_custom_call.1} parent=5 // pred_region
        %s191 = ssub.s32 %s20, 1
        // Predicated region
        $region13: #{tpu_custom_call.1} parent=11 // pred_check
          %p192 = pneg %p67
        $region14: #{tpu_custom_call.1} parent=11 // pred_check_branch
          %194 = sbr.rel (%p192) target = $region16
        $region15: #{tpu_custom_call.1} parent=11 // pred_region
          %s196 = ssub.s32 128, 128
          %197 = vsyncadd [#allocation6], %s196
          %s199 = sshll.u32 [#allocation5], 4
          %s200 = int_to_ptr.vmem [resolvable:$true] %s199
          %202 = dma.hbm_to_vmem [thread:$0]  %s1, 128, %s200, [#allocation6]
        $region16: #{tpu_custom_call.1} parent=11 // pred_fallthru
          _
        // Predicated region
        $region17: #{tpu_custom_call.1} parent=11 // pred_check
          %p203 = pneg %p88
        $region18: #{tpu_custom_call.1} parent=11 // pred_check_branch
          %205 = sbr.rel (%p203) target = $region20
        $region19: #{tpu_custom_call.1} parent=11 // pred_region
          %s207 = ssub.s32 512, 512
          %208 = vsyncadd [#allocation6], %s207
          %s209 = sshll.u32 [#allocation7], 4
          %s210 = int_to_ptr.vmem [resolvable:$true] %s209
          %215 = dma.hbm_to_vmem [thread:$0]  %s2, 512, %s210, [#allocation6], 128, 128, 8
        $region20: #{tpu_custom_call.1} parent=11 // pred_fallthru
          _
        // Predicated region
        $region21: #{tpu_custom_call.1} parent=11 // pred_check
          %p216 = pneg %p109
        $region22: #{tpu_custom_call.1} parent=11 // pred_check_branch
          %218 = sbr.rel (%p216) target = $region24
        $region23: #{tpu_custom_call.1} parent=11 // pred_region
          _
        $region24: #{tpu_custom_call.1} parent=11 // pred_fallthru
          _
        // Predicated region
        $region25: #{tpu_custom_call.1} parent=11 // pred_check
          %p219 = pneg %p130
        $region26: #{tpu_custom_call.1} parent=11 // pred_check_branch
          %221 = sbr.rel (%p219) target = $region28
        $region27: #{tpu_custom_call.1} parent=11 // pred_region
          %s223 = ssub.s32 512, 512
          %224 = vsyncadd [#allocation9], %s223
          %s225 = sshll.u32 [#allocation8], 4
          %s226 = int_to_ptr.vmem [resolvable:$true] %s225
          %231 = dma.hbm_to_vmem [thread:$0]  %s4, 512, %s226, [#allocation9], 128, 128, 8
        $region28: #{tpu_custom_call.1} parent=11 // pred_fallthru
          _
        // Predicated region
        $region29: #{tpu_custom_call.1} parent=11 // pred_check
          %p232 = pneg %p151
        $region30: #{tpu_custom_call.1} parent=11 // pred_check_branch
          %234 = sbr.rel (%p232) target = $region32
        $region31: #{tpu_custom_call.1} parent=11 // pred_region
          _
        $region32: #{tpu_custom_call.1} parent=11 // pred_fallthru
          _
      $region12: #{tpu_custom_call.1} parent=5 // pred_fallthru
        _
      %p235 = scmp.lt.s32.totalorder %s20, 2
      // Predicated region
      $region33: #{tpu_custom_call.1} parent=5 // pred_check
        %p236 = pneg %p235
      $region34: #{tpu_custom_call.1} parent=5 // pred_check_branch
        %238 = sbr.rel (%p236) target = $region36
      $region35: #{tpu_custom_call.1} parent=5 // pred_region
        // Predicated region
        $region37: #{tpu_custom_call.1} parent=35 // pred_check
          %p239 = pneg %p40
        $region38: #{tpu_custom_call.1} parent=35 // pred_check_branch
          %241 = sbr.rel (%p239) target = $region40
        $region39: #{tpu_custom_call.1} parent=35 // pred_region
          %s242 = sand.u32 %s30, 1
          %s243 = scalar_lea.sflag [#allocation3], %s242
          %s244 = sand.u32 %s30, 1
          %s245 = smul.addr %s244, 8
          %s246 = scalar_lea.vmem [#allocation2], %s245
          %s248 = ssub.s32 128, 128
          %249 = vsyncadd %s243, %s248
          %s250 = smul.addr %s20, 128
          %s251 = scalar_lea.hbm %s0, %s250
          %s253 = sshll.u32 %s246, 4
          %s254 = int_to_ptr.vmem [resolvable:$true] %s253
          %256 = dma.hbm_to_vmem [thread:$0]  %s251, 128, %s254, %s243
        $region40: #{tpu_custom_call.1} parent=35 // pred_fallthru
          _
      $region36: #{tpu_custom_call.1} parent=5 // pred_fallthru
        _
      %p257 = scmp.le.s32.totalorder 1, %s20
      %p258 = scmp.lt.s32.totalorder %s20, 3
      %p259 = pnand %p257, %p258
      %p260 = pneg %p259
      // Predicated region
      $region41: #{tpu_custom_call.1} parent=5 // pred_check
        _
      $region42: #{tpu_custom_call.1} parent=5 // pred_check_branch
        %262 = sbr.rel (%p259) target = $region44
      $region43: #{tpu_custom_call.1} parent=5 // pred_region
        %s263 = ssub.s32 %s20, 1
        %s264 = sand.u32 %s33, 1
        %s265 = scalar_lea.sflag [#allocation3], %s264
        %s266 = sand.u32 %s33, 1
        %s267 = smul.addr %s266, 8
        %s268 = scalar_lea.vmem [#allocation2], %s267
        // Predicated region
        $region45: #{tpu_custom_call.1} parent=43 // pred_check
          %p269 = pneg %p46
        $region46: #{tpu_custom_call.1} parent=43 // pred_check_branch
          %271 = sbr.rel (%p269) target = $region48
        $region47: #{tpu_custom_call.1} parent=43 // pred_region
          %272 = dma.done %s265, 128
        $region48: #{tpu_custom_call.1} parent=43 // pred_fallthru
          _
        // Predicated region
        $region49: #{tpu_custom_call.1} parent=43 // pred_check
          %p273 = pneg %p67
        $region50: #{tpu_custom_call.1} parent=43 // pred_check_branch
          %275 = sbr.rel (%p273) target = $region52
        $region51: #{tpu_custom_call.1} parent=43 // pred_region
          %276 = dma.done [#allocation6], 128
        $region52: #{tpu_custom_call.1} parent=43 // pred_fallthru
          _
        // Predicated region
        $region53: #{tpu_custom_call.1} parent=43 // pred_check
          %p277 = pneg %p88
        $region54: #{tpu_custom_call.1} parent=43 // pred_check_branch
          %279 = sbr.rel (%p277) target = $region56
        $region55: #{tpu_custom_call.1} parent=43 // pred_region
          %280 = dma.done [#allocation6], 512
        $region56: #{tpu_custom_call.1} parent=43 // pred_fallthru
          _
        // Predicated region
        $region57: #{tpu_custom_call.1} parent=43 // pred_check
          %p281 = pneg %p130
        $region58: #{tpu_custom_call.1} parent=43 // pred_check_branch
          %283 = sbr.rel (%p281) target = $region60
        $region59: #{tpu_custom_call.1} parent=43 // pred_region
          %284 = dma.done [#allocation9], 512
        $region60: #{tpu_custom_call.1} parent=43 // pred_fallthru
          _
        %s285 = sand.u32 %s33, 1
        %s286 = scalar_lea.sflag [#allocation3], %s285
        %s287 = sand.u32 %s33, 1
        %s288 = smul.addr %s287, 8
        %s289 = scalar_lea.vmem [#allocation2], %s288
        %p290 = pneg %p46
        %p291 = pneg %p43
        %p292 = pneg %p67
        %p293 = pneg %p64
        %p294 = pneg %p88
        %p295 = pneg %p85
        %p296 = pneg %p109
        %p297 = pneg %p106
        %p298 = pneg %p130
        %p299 = pneg %p127
        %p300 = pneg %p151
        %p301 = pneg %p148
        %p302 = pneg %p177
        %p303 = pneg %p174
        %s304 = sand.u32 %s164, 1
        %s305 = scalar_lea.sflag [#allocation4], %s304
        %s306 = sand.u32 %s164, 1
        %s307 = smul.addr %s306, 8
        %s308 = scalar_lea.vmem [#allocation10], %s307
        %v309 = vld [vmem:[#allocation5] sm:$0xff]
        %v310 = vld [vmem:[#allocation7] sm:$0xff]
        %v311 = vld [vmem:[#allocation7 + $0x8] sm:$0xff]
        %v312 = vld [vmem:[#allocation7 + $0x10] sm:$0xff]
        %v313 = vld [vmem:[#allocation7 + $0x18] sm:$0xff]
        %v314 = vld [vmem:[%s3] sm:$0x1]
        %v315 = vld [vmem:[#allocation8] sm:$0xff]
        %v316 = vld [vmem:[#allocation8 + $0x8] sm:$0xff]
        %v317 = vld [vmem:[#allocation8 + $0x10] sm:$0xff]
        %v318 = vld [vmem:[#allocation8 + $0x18] sm:$0xff]
        %v319 = vld [vmem:[%s5] sm:$0x1]
        %v320 = vld [vmem:[%s268] sm:$0xff]
        %v321 = vadd.f32 %v320, %v309
        %v323 = vlaneseq
        %v324 = vshrl.u32 %v323, 7
        %v325 = vsub.s32 0, %v324
        %v326 = vrot.slane %v314, %v325
        %vm328 = vcmask 261120
        %v330 = vsel %vm328, %v321, 0
        %332 = vmatprep.subr.mxu0 0.0
        %333 = vmatpush1.msra.mxu0 0.0
        %334 = vmatprep.subr.mxu0 0.0
        %335 = vmatpush1.msra.mxu0 0.0
        %336 = vmatprep.subr.mxu0 0.0
        %337 = vmatpush1.msra.mxu0 0.0
        %338 = vmatprep.subr.mxu0 0.0
        %339 = vmatpush1.msra.mxu0 0.0
        %340 = vmatprep.subr.mxu0 0.0
        %341 = vmatpush1.msra.mxu0 0.0
        %342 = vmatprep.subr.mxu0 0.0
        %343 = vmatpush1.msra.mxu0 0.0
        %344 = vmatprep.subr.mxu0 0.0
        %345 = vmatpush1.msra.mxu0 0.0
        %346 = vmatprep.subr.mxu0 0.0
        %347 = vmatpush1.msra.mxu0 0.0
        %348 = vmatprep.subr.mxu0 0.0
        %349 = vmatpush1.msra.mxu0 0.0
        %350 = vmatprep.subr.mxu0 0.0
        %351 = vmatpush1.msra.mxu0 0.0
        %352 = vmatprep.subr.mxu0 0.0
        %353 = vmatpush1.msra.mxu0 0.0
        %354 = vmatprep.subr.mxu0 0.0
        %355 = vmatpush1.msra.mxu0 0.0
        %356 = vmatprep.subr.mxu0 0.0
        %357 = vmatpush1.msra.mxu0 %v313
        %358 = vmatprep.subr.mxu0 0.0
        %359 = vmatpush1.msra.mxu0 %v312
        %360 = vmatprep.subr.mxu0 0.0
        %361 = vmatpush1.msra.mxu0 %v311
        %362 = vmatprep.subr.mxu0 0.0
        %363 = vmatpush1.msra.mxu0 %v310
        %364 = vmatprep.subr.mxu0 0.0
        %365 = vmatpush2.msra.mxu0 0.0
        %366 = vmatprep.subr.mxu0 0.0
        %367 = vmatpush2.msra.mxu0 0.0
        %368 = vmatprep.subr.mxu0 0.0
        %369 = vmatpush2.msra.mxu0 0.0
        %370 = vmatprep.subr.mxu0 0.0
        %371 = vmatpush2.msra.mxu0 0.0
        %372 = vmatprep.subr.mxu0 0.0
        %373 = vmatpush2.msra.mxu0 0.0
        %374 = vmatprep.subr.mxu0 0.0
        %375 = vmatpush2.msra.mxu0 0.0
        %376 = vmatprep.subr.mxu0 0.0
        %377 = vmatpush2.msra.mxu0 0.0
        %378 = vmatprep.subr.mxu0 0.0
        %379 = vmatpush2.msra.mxu0 0.0
        %380 = vmatprep.subr.mxu0 0.0
        %381 = vmatpush2.msra.mxu0 0.0
        %382 = vmatprep.subr.mxu0 0.0
        %383 = vmatpush2.msra.mxu0 0.0
        %384 = vmatprep.subr.mxu0 0.0
        %385 = vmatpush2.msra.mxu0 0.0
        %386 = vmatprep.subr.mxu0 0.0
        %387 = vmatpush2.msra.mxu0 0.0
        %388 = vmatprep.subr.mxu0 0.0
        %389 = vmatpush2.msra.mxu0 0.0
        %390 = vmatprep.subr.mxu0 0.0
        %391 = vmatpush2.msra.mxu0 0.0
        %392 = vmatprep.subr.mxu0 0.0
        %393 = vmatpush2.msra.mxu0 0.0
        %394 = vmatprep.subr.mxu0 0.0
        %395 = vmatpush2.msra.mxu0 0.0
        %396 = vmatprep.mubr.f32.mxu0 0.0
        %397 = vmatmul.mubr.f32.gmra.mxu0 %v330
        %v398 = vpop.f32.mrf.mxu0
        %v399 = vadd.f32 %v326, %v398
        %v400 = vpop.f32.mrf.mxu0
        %401 = vdwg.mxu0
        %v403 = vlaneseq
        %v404 = vshrl.u32 %v403, 7
        %v405 = vsub.s32 0, %v404
        %v406 = vrot.slane %v319, %v405
        %409 = vrot.lane.b32.xlu0 %v399, 96
        %v410 = vpop.permute.xlu0 %409
        %vm411 = vcmask 64512
        %v412 = vsel %vm411, %v399, 0
        %v414 = vsel %vm411, %v410, 0
        %416 = vmatprep.subr.mxu0 0.0
        %417 = vmatpush1.xpose.msra.mxu0 0.0
        %418 = vmatprep.subr.mxu0 0.0
        %419 = vmatpush1.xpose.msra.mxu0 0.0
        %420 = vmatprep.subr.mxu0 0.0
        %421 = vmatpush1.xpose.msra.mxu0 0.0
        %422 = vmatprep.subr.mxu0 0.0
        %423 = vmatpush1.xpose.msra.mxu0 0.0
        %424 = vmatprep.subr.mxu0 0.0
        %425 = vmatpush1.xpose.msra.mxu0 0.0
        %426 = vmatprep.subr.mxu0 0.0
        %427 = vmatpush1.xpose.msra.mxu0 0.0
        %428 = vmatprep.subr.mxu0 0.0
        %429 = vmatpush1.xpose.msra.mxu0 0.0
        %430 = vmatprep.subr.mxu0 0.0
        %431 = vmatpush1.xpose.msra.mxu0 0.0
        %432 = vmatprep.subr.mxu0 0.0
        %433 = vmatpush1.xpose.msra.mxu0 0.0
        %434 = vmatprep.subr.mxu0 0.0
        %435 = vmatpush1.xpose.msra.mxu0 0.0
        %436 = vmatprep.subr.mxu0 0.0
        %437 = vmatpush1.xpose.msra.mxu0 0.0
        %438 = vmatprep.subr.mxu0 0.0
        %439 = vmatpush1.xpose.msra.mxu0 0.0
        %440 = vmatprep.subr.mxu0 0.0
        %441 = vmatpush1.xpose.msra.mxu0 0.0
        %442 = vmatprep.subr.mxu0 0.0
        %443 = vmatpush1.xpose.msra.mxu0 0.0
        %444 = vmatprep.subr.mxu0 0.0
        %445 = vmatpush1.xpose.msra.mxu0 0.0
        %446 = vmatprep.subr.mxu0 0.0
        %447 = vmatpush1.xpose.msra.mxu0 %v414
        %448 = vmatprep.subr.mxu0 0.0
        %449 = vmatpush2.xpose.msra.mxu0 0.0
        %450 = vmatprep.subr.mxu0 0.0
        %451 = vmatpush2.xpose.msra.mxu0 0.0
        %452 = vmatprep.subr.mxu0 0.0
        %453 = vmatpush2.xpose.msra.mxu0 0.0
        %454 = vmatprep.subr.mxu0 0.0
        %455 = vmatpush2.xpose.msra.mxu0 0.0
        %456 = vmatprep.subr.mxu0 0.0
        %457 = vmatpush2.xpose.msra.mxu0 0.0
        %458 = vmatprep.subr.mxu0 0.0
        %459 = vmatpush2.xpose.msra.mxu0 0.0
        %460 = vmatprep.subr.mxu0 0.0
        %461 = vmatpush2.xpose.msra.mxu0 0.0
        %462 = vmatprep.subr.mxu0 0.0
        %463 = vmatpush2.xpose.msra.mxu0 0.0
        %464 = vmatprep.subr.mxu0 0.0
        %465 = vmatpush2.xpose.msra.mxu0 0.0
        %466 = vmatprep.subr.mxu0 0.0
        %467 = vmatpush2.xpose.msra.mxu0 0.0
        %468 = vmatprep.subr.mxu0 0.0
        %469 = vmatpush2.xpose.msra.mxu0 0.0
        %470 = vmatprep.subr.mxu0 0.0
        %471 = vmatpush2.xpose.msra.mxu0 0.0
        %472 = vmatprep.subr.mxu0 0.0
        %473 = vmatpush2.xpose.msra.mxu0 0.0
        %474 = vmatprep.subr.mxu0 0.0
        %475 = vmatpush2.xpose.msra.mxu0 0.0
        %476 = vmatprep.subr.mxu0 0.0
        %477 = vmatpush2.xpose.msra.mxu0 0.0
        %478 = vmatprep.subr.mxu0 0.0
        %479 = vmatpush2.xpose.msra.mxu0 0.0
        %480 = vmatprep.mubr.f32.mxu0 0.0
        %481 = vmatmul.mubr.f32.gmra.mxu0 %v412
        %v482 = vpop.f32.mrf.mxu0
        %v483 = vadd.f32 0.0, %v482
        %v484 = vpop.f32.mrf.mxu0
        %485 = vdwg.mxu0
        %v486 = vsel %vm411, %v483, -inf
        %487 = vmax.xlane.f32.xlu0 %v486
        %v488 = vpop.xlane.xlu0 %487
        %v489 = vsub.f32 %v483, %v488
        %v490 = vmul.f32 %v489, 1.442695
        %v491 = vpow.pop %v490
        %v492 = vsel %vm411, %v491, 0.0
        %493 = vadd.xlane.f32.xlu0 %v492
        %v494 = vpop.xlane.xlu0 %493
        %v495 = vrcp.pop %v494
        %v496 = vmul.f32 %v491, %v495
        %497 = vrot.lane.b32.xlu0 %v399, 64
        %v498 = vpop.permute.xlu0 %497
        %v501 = vsel %vm411, %v496, 0
        %503 = vmatprep.subr.mxu0 0.0
        %504 = vmatpush1.msra.mxu0 0.0
        %505 = vmatprep.subr.mxu0 0.0
        %506 = vmatpush1.msra.mxu0 0.0
        %507 = vmatprep.subr.mxu0 0.0
        %508 = vmatpush1.msra.mxu0 0.0
        %509 = vmatprep.subr.mxu0 0.0
        %510 = vmatpush1.msra.mxu0 0.0
        %511 = vmatprep.subr.mxu0 0.0
        %512 = vmatpush1.msra.mxu0 0.0
        %513 = vmatprep.subr.mxu0 0.0
        %514 = vmatpush1.msra.mxu0 0.0
        %515 = vmatprep.subr.mxu0 0.0
        %516 = vmatpush1.msra.mxu0 0.0
        %517 = vmatprep.subr.mxu0 0.0
        %518 = vmatpush1.msra.mxu0 0.0
        %519 = vmatprep.subr.mxu0 0.0
        %520 = vmatpush1.msra.mxu0 0.0
        %521 = vmatprep.subr.mxu0 0.0
        %522 = vmatpush1.msra.mxu0 0.0
        %523 = vmatprep.subr.mxu0 0.0
        %524 = vmatpush1.msra.mxu0 0.0
        %525 = vmatprep.subr.mxu0 0.0
        %526 = vmatpush1.msra.mxu0 0.0
        %527 = vmatprep.subr.mxu0 0.0
        %528 = vmatpush1.msra.mxu0 0.0
        %529 = vmatprep.subr.mxu0 0.0
        %530 = vmatpush1.msra.mxu0 0.0
        %531 = vmatprep.subr.mxu0 0.0
        %532 = vmatpush1.msra.mxu0 0.0
        %533 = vmatprep.subr.mxu0 0.0
        %534 = vmatpush1.msra.mxu0 %v498
        %535 = vmatprep.subr.mxu0 0.0
        %536 = vmatpush2.msra.mxu0 0.0
        %537 = vmatprep.subr.mxu0 0.0
        %538 = vmatpush2.msra.mxu0 0.0
        %539 = vmatprep.subr.mxu0 0.0
        %540 = vmatpush2.msra.mxu0 0.0
        %541 = vmatprep.subr.mxu0 0.0
        %542 = vmatpush2.msra.mxu0 0.0
        %543 = vmatprep.subr.mxu0 0.0
        %544 = vmatpush2.msra.mxu0 0.0
        %545 = vmatprep.subr.mxu0 0.0
        %546 = vmatpush2.msra.mxu0 0.0
        %547 = vmatprep.subr.mxu0 0.0
        %548 = vmatpush2.msra.mxu0 0.0
        %549 = vmatprep.subr.mxu0 0.0
        %550 = vmatpush2.msra.mxu0 0.0
        %551 = vmatprep.subr.mxu0 0.0
        %552 = vmatpush2.msra.mxu0 0.0
        %553 = vmatprep.subr.mxu0 0.0
        %554 = vmatpush2.msra.mxu0 0.0
        %555 = vmatprep.subr.mxu0 0.0
        %556 = vmatpush2.msra.mxu0 0.0
        %557 = vmatprep.subr.mxu0 0.0
        %558 = vmatpush2.msra.mxu0 0.0
        %559 = vmatprep.subr.mxu0 0.0
        %560 = vmatpush2.msra.mxu0 0.0
        %561 = vmatprep.subr.mxu0 0.0
        %562 = vmatpush2.msra.mxu0 0.0
        %563 = vmatprep.subr.mxu0 0.0
        %564 = vmatpush2.msra.mxu0 0.0
        %565 = vmatprep.subr.mxu0 0.0
        %566 = vmatpush2.msra.mxu0 0.0
        %567 = vmatprep.mubr.f32.mxu0 0.0
        %568 = vmatmul.mubr.f32.gmra.mxu0 %v501
        %v569 = vpop.f32.mrf.mxu0
        %v570 = vadd.f32 0.0, %v569
        %v571 = vpop.f32.mrf.mxu0
        %572 = vdwg.mxu0
        %v574 = vsel %vm411, %v570, 0
        %576 = vmatprep.subr.mxu0 0.0
        %577 = vmatpush1.msra.mxu0 0.0
        %578 = vmatprep.subr.mxu0 0.0
        %579 = vmatpush1.msra.mxu0 0.0
        %580 = vmatprep.subr.mxu0 0.0
        %581 = vmatpush1.msra.mxu0 0.0
        %582 = vmatprep.subr.mxu0 0.0
        %583 = vmatpush1.msra.mxu0 0.0
        %584 = vmatprep.subr.mxu0 0.0
        %585 = vmatpush1.msra.mxu0 0.0
        %586 = vmatprep.subr.mxu0 0.0
        %587 = vmatpush1.msra.mxu0 0.0
        %588 = vmatprep.subr.mxu0 0.0
        %589 = vmatpush1.msra.mxu0 0.0
        %590 = vmatprep.subr.mxu0 0.0
        %591 = vmatpush1.msra.mxu0 0.0
        %592 = vmatprep.subr.mxu0 0.0
        %593 = vmatpush1.msra.mxu0 0.0
        %594 = vmatprep.subr.mxu0 0.0
        %595 = vmatpush1.msra.mxu0 0.0
        %596 = vmatprep.subr.mxu0 0.0
        %597 = vmatpush1.msra.mxu0 0.0
        %598 = vmatprep.subr.mxu0 0.0
        %599 = vmatpush1.msra.mxu0 0.0
        %600 = vmatprep.subr.mxu0 0.0
        %601 = vmatpush1.msra.mxu0 0.0
        %602 = vmatprep.subr.mxu0 0.0
        %603 = vmatpush1.msra.mxu0 0.0
        %604 = vmatprep.subr.mxu0 0.0
        %605 = vmatpush1.msra.mxu0 0.0
        %606 = vmatprep.subr.mxu0 0.0
        %607 = vmatpush1.msra.mxu0 %v315
        %608 = vmatprep.subr.mxu0 0.0
        %609 = vmatpush2.msra.mxu0 0.0
        %610 = vmatprep.subr.mxu0 0.0
        %611 = vmatpush2.msra.mxu0 0.0
        %612 = vmatprep.subr.mxu0 0.0
        %613 = vmatpush2.msra.mxu0 0.0
        %614 = vmatprep.subr.mxu0 0.0
        %615 = vmatpush2.msra.mxu0 0.0
        %616 = vmatprep.subr.mxu0 0.0
        %617 = vmatpush2.msra.mxu0 0.0
        %618 = vmatprep.subr.mxu0 0.0
        %619 = vmatpush2.msra.mxu0 0.0
        %620 = vmatprep.subr.mxu0 0.0
        %621 = vmatpush2.msra.mxu0 0.0
        %622 = vmatprep.subr.mxu0 0.0
        %623 = vmatpush2.msra.mxu0 0.0
        %624 = vmatprep.subr.mxu0 0.0
        %625 = vmatpush2.msra.mxu0 0.0
        %626 = vmatprep.subr.mxu0 0.0
        %627 = vmatpush2.msra.mxu0 0.0
        %628 = vmatprep.subr.mxu0 0.0
        %629 = vmatpush2.msra.mxu0 0.0
        %630 = vmatprep.subr.mxu0 0.0
        %631 = vmatpush2.msra.mxu0 0.0
        %632 = vmatprep.subr.mxu0 0.0
        %633 = vmatpush2.msra.mxu0 0.0
        %634 = vmatprep.subr.mxu0 0.0
        %635 = vmatpush2.msra.mxu0 0.0
        %636 = vmatprep.subr.mxu0 0.0
        %637 = vmatpush2.msra.mxu0 0.0
        %638 = vmatprep.subr.mxu0 0.0
        %639 = vmatpush2.msra.mxu0 0.0
        %640 = vmatprep.mubr.f32.mxu0 0.0
        %641 = vmatmul.mubr.f32.gmra.mxu0 %v574
        %v642 = vpop.f32.mrf.mxu0
        %v643 = vadd.f32 0.0, %v642
        %v644 = vpop.f32.mrf.mxu0
        %645 = vdwg.mxu0
        %v646 = vadd.f32 %v406, %v643
        %647 = vrot.lane.b32.xlu0 %v399, 120
        %v648 = vpop.permute.xlu0 %647
        %649 = vrot.lane.b32.xlu0 %v399, 88
        %v650 = vpop.permute.xlu0 %649
        %v651 = vsel %vm411, %v648, 0
        %v653 = vsel %vm411, %v650, 0
        %655 = vmatprep.subr.mxu0 0.0
        %656 = vmatpush1.xpose.msra.mxu0 0.0
        %657 = vmatprep.subr.mxu0 0.0
        %658 = vmatpush1.xpose.msra.mxu0 0.0
        %659 = vmatprep.subr.mxu0 0.0
        %660 = vmatpush1.xpose.msra.mxu0 0.0
        %661 = vmatprep.subr.mxu0 0.0
        %662 = vmatpush1.xpose.msra.mxu0 0.0
        %663 = vmatprep.subr.mxu0 0.0
        %664 = vmatpush1.xpose.msra.mxu0 0.0
        %665 = vmatprep.subr.mxu0 0.0
        %666 = vmatpush1.xpose.msra.mxu0 0.0
        %667 = vmatprep.subr.mxu0 0.0
        %668 = vmatpush1.xpose.msra.mxu0 0.0
        %669 = vmatprep.subr.mxu0 0.0
        %670 = vmatpush1.xpose.msra.mxu0 0.0
        %671 = vmatprep.subr.mxu0 0.0
        %672 = vmatpush1.xpose.msra.mxu0 0.0
        %673 = vmatprep.subr.mxu0 0.0
        %674 = vmatpush1.xpose.msra.mxu0 0.0
        %675 = vmatprep.subr.mxu0 0.0
        %676 = vmatpush1.xpose.msra.mxu0 0.0
        %677 = vmatprep.subr.mxu0 0.0
        %678 = vmatpush1.xpose.msra.mxu0 0.0
        %679 = vmatprep.subr.mxu0 0.0
        %680 = vmatpush1.xpose.msra.mxu0 0.0
        %681 = vmatprep.subr.mxu0 0.0
        %682 = vmatpush1.xpose.msra.mxu0 0.0
        %683 = vmatprep.subr.mxu0 0.0
        %684 = vmatpush1.xpose.msra.mxu0 0.0
        %685 = vmatprep.subr.mxu0 0.0
        %686 = vmatpush1.xpose.msra.mxu0 %v653
        %687 = vmatprep.subr.mxu0 0.0
        %688 = vmatpush2.xpose.msra.mxu0 0.0
        %689 = vmatprep.subr.mxu0 0.0
        %690 = vmatpush2.xpose.msra.mxu0 0.0
        %691 = vmatprep.subr.mxu0 0.0
        %692 = vmatpush2.xpose.msra.mxu0 0.0
        %693 = vmatprep.subr.mxu0 0.0
        %694 = vmatpush2.xpose.msra.mxu0 0.0
        %695 = vmatprep.subr.mxu0 0.0
        %696 = vmatpush2.xpose.msra.mxu0 0.0
        %697 = vmatprep.subr.mxu0 0.0
        %698 = vmatpush2.xpose.msra.mxu0 0.0
        %699 = vmatprep.subr.mxu0 0.0
        %700 = vmatpush2.xpose.msra.mxu0 0.0
        %701 = vmatprep.subr.mxu0 0.0
        %702 = vmatpush2.xpose.msra.mxu0 0.0
        %703 = vmatprep.subr.mxu0 0.0
        %704 = vmatpush2.xpose.msra.mxu0 0.0
        %705 = vmatprep.subr.mxu0 0.0
        %706 = vmatpush2.xpose.msra.mxu0 0.0
        %707 = vmatprep.subr.mxu0 0.0
        %708 = vmatpush2.xpose.msra.mxu0 0.0
        %709 = vmatprep.subr.mxu0 0.0
        %710 = vmatpush2.xpose.msra.mxu0 0.0
        %711 = vmatprep.subr.mxu0 0.0
        %712 = vmatpush2.xpose.msra.mxu0 0.0
        %713 = vmatprep.subr.mxu0 0.0
        %714 = vmatpush2.xpose.msra.mxu0 0.0
        %715 = vmatprep.subr.mxu0 0.0
        %716 = vmatpush2.xpose.msra.mxu0 0.0
        %717 = vmatprep.subr.mxu0 0.0
        %718 = vmatpush2.xpose.msra.mxu0 0.0
        %719 = vmatprep.mubr.f32.mxu0 0.0
        %720 = vmatmul.mubr.f32.gmra.mxu0 %v651
        %v721 = vpop.f32.mrf.mxu0
        %v722 = vadd.f32 0.0, %v721
        %v723 = vpop.f32.mrf.mxu0
        %724 = vdwg.mxu0
        %v725 = vsel %vm411, %v722, -inf
        %726 = vmax.xlane.f32.xlu0 %v725
        %v727 = vpop.xlane.xlu0 %726
        %v728 = vsub.f32 %v722, %v727
        %v729 = vmul.f32 %v728, 1.442695
        %v730 = vpow.pop %v729
        %v731 = vsel %vm411, %v730, 0.0
        %732 = vadd.xlane.f32.xlu0 %v731
        %v733 = vpop.xlane.xlu0 %732
        %v734 = vrcp.pop %v733
        %v735 = vmul.f32 %v730, %v734
        %736 = vrot.lane.b32.xlu0 %v399, 56
        %v737 = vpop.permute.xlu0 %736
        %v740 = vsel %vm411, %v735, 0
        %742 = vmatprep.subr.mxu0 0.0
        %743 = vmatpush1.msra.mxu0 0.0
        %744 = vmatprep.subr.mxu0 0.0
        %745 = vmatpush1.msra.mxu0 0.0
        %746 = vmatprep.subr.mxu0 0.0
        %747 = vmatpush1.msra.mxu0 0.0
        %748 = vmatprep.subr.mxu0 0.0
        %749 = vmatpush1.msra.mxu0 0.0
        %750 = vmatprep.subr.mxu0 0.0
        %751 = vmatpush1.msra.mxu0 0.0
        %752 = vmatprep.subr.mxu0 0.0
        %753 = vmatpush1.msra.mxu0 0.0
        %754 = vmatprep.subr.mxu0 0.0
        %755 = vmatpush1.msra.mxu0 0.0
        %756 = vmatprep.subr.mxu0 0.0
        %757 = vmatpush1.msra.mxu0 0.0
        %758 = vmatprep.subr.mxu0 0.0
        %759 = vmatpush1.msra.mxu0 0.0
        %760 = vmatprep.subr.mxu0 0.0
        %761 = vmatpush1.msra.mxu0 0.0
        %762 = vmatprep.subr.mxu0 0.0
        %763 = vmatpush1.msra.mxu0 0.0
        %764 = vmatprep.subr.mxu0 0.0
        %765 = vmatpush1.msra.mxu0 0.0
        %766 = vmatprep.subr.mxu0 0.0
        %767 = vmatpush1.msra.mxu0 0.0
        %768 = vmatprep.subr.mxu0 0.0
        %769 = vmatpush1.msra.mxu0 0.0
        %770 = vmatprep.subr.mxu0 0.0
        %771 = vmatpush1.msra.mxu0 0.0
        %772 = vmatprep.subr.mxu0 0.0
        %773 = vmatpush1.msra.mxu0 %v737
        %774 = vmatprep.subr.mxu0 0.0
        %775 = vmatpush2.msra.mxu0 0.0
        %776 = vmatprep.subr.mxu0 0.0
        %777 = vmatpush2.msra.mxu0 0.0
        %778 = vmatprep.subr.mxu0 0.0
        %779 = vmatpush2.msra.mxu0 0.0
        %780 = vmatprep.subr.mxu0 0.0
        %781 = vmatpush2.msra.mxu0 0.0
        %782 = vmatprep.subr.mxu0 0.0
        %783 = vmatpush2.msra.mxu0 0.0
        %784 = vmatprep.subr.mxu0 0.0
        %785 = vmatpush2.msra.mxu0 0.0
        %786 = vmatprep.subr.mxu0 0.0
        %787 = vmatpush2.msra.mxu0 0.0
        %788 = vmatprep.subr.mxu0 0.0
        %789 = vmatpush2.msra.mxu0 0.0
        %790 = vmatprep.subr.mxu0 0.0
        %791 = vmatpush2.msra.mxu0 0.0
        %792 = vmatprep.subr.mxu0 0.0
        %793 = vmatpush2.msra.mxu0 0.0
        %794 = vmatprep.subr.mxu0 0.0
        %795 = vmatpush2.msra.mxu0 0.0
        %796 = vmatprep.subr.mxu0 0.0
        %797 = vmatpush2.msra.mxu0 0.0
        %798 = vmatprep.subr.mxu0 0.0
        %799 = vmatpush2.msra.mxu0 0.0
        %800 = vmatprep.subr.mxu0 0.0
        %801 = vmatpush2.msra.mxu0 0.0
        %802 = vmatprep.subr.mxu0 0.0
        %803 = vmatpush2.msra.mxu0 0.0
        %804 = vmatprep.subr.mxu0 0.0
        %805 = vmatpush2.msra.mxu0 0.0
        %806 = vmatprep.mubr.f32.mxu0 0.0
        %807 = vmatmul.mubr.f32.gmra.mxu0 %v740
        %v808 = vpop.f32.mrf.mxu0
        %v809 = vadd.f32 0.0, %v808
        %v810 = vpop.f32.mrf.mxu0
        %811 = vdwg.mxu0
        %v813 = vsel %vm411, %v809, 0
        %815 = vmatprep.subr.mxu0 0.0
        %816 = vmatpush1.msra.mxu0 0.0
        %817 = vmatprep.subr.mxu0 0.0
        %818 = vmatpush1.msra.mxu0 0.0
        %819 = vmatprep.subr.mxu0 0.0
        %820 = vmatpush1.msra.mxu0 0.0
        %821 = vmatprep.subr.mxu0 0.0
        %822 = vmatpush1.msra.mxu0 0.0
        %823 = vmatprep.subr.mxu0 0.0
        %824 = vmatpush1.msra.mxu0 0.0
        %825 = vmatprep.subr.mxu0 0.0
        %826 = vmatpush1.msra.mxu0 0.0
        %827 = vmatprep.subr.mxu0 0.0
        %828 = vmatpush1.msra.mxu0 0.0
        %829 = vmatprep.subr.mxu0 0.0
        %830 = vmatpush1.msra.mxu0 0.0
        %831 = vmatprep.subr.mxu0 0.0
        %832 = vmatpush1.msra.mxu0 0.0
        %833 = vmatprep.subr.mxu0 0.0
        %834 = vmatpush1.msra.mxu0 0.0
        %835 = vmatprep.subr.mxu0 0.0
        %836 = vmatpush1.msra.mxu0 0.0
        %837 = vmatprep.subr.mxu0 0.0
        %838 = vmatpush1.msra.mxu0 0.0
        %839 = vmatprep.subr.mxu0 0.0
        %840 = vmatpush1.msra.mxu0 0.0
        %841 = vmatprep.subr.mxu0 0.0
        %842 = vmatpush1.msra.mxu0 0.0
        %843 = vmatprep.subr.mxu0 0.0
        %844 = vmatpush1.msra.mxu0 0.0
        %845 = vmatprep.subr.mxu0 0.0
        %846 = vmatpush1.msra.mxu0 %v316
        %847 = vmatprep.subr.mxu0 0.0
        %848 = vmatpush2.msra.mxu0 0.0
        %849 = vmatprep.subr.mxu0 0.0
        %850 = vmatpush2.msra.mxu0 0.0
        %851 = vmatprep.subr.mxu0 0.0
        %852 = vmatpush2.msra.mxu0 0.0
        %853 = vmatprep.subr.mxu0 0.0
        %854 = vmatpush2.msra.mxu0 0.0
        %855 = vmatprep.subr.mxu0 0.0
        %856 = vmatpush2.msra.mxu0 0.0
        %857 = vmatprep.subr.mxu0 0.0
        %858 = vmatpush2.msra.mxu0 0.0
        %859 = vmatprep.subr.mxu0 0.0
        %860 = vmatpush2.msra.mxu0 0.0
        %861 = vmatprep.subr.mxu0 0.0
        %862 = vmatpush2.msra.mxu0 0.0
        %863 = vmatprep.subr.mxu0 0.0
        %864 = vmatpush2.msra.mxu0 0.0
        %865 = vmatprep.subr.mxu0 0.0
        %866 = vmatpush2.msra.mxu0 0.0
        %867 = vmatprep.subr.mxu0 0.0
        %868 = vmatpush2.msra.mxu0 0.0
        %869 = vmatprep.subr.mxu0 0.0
        %870 = vmatpush2.msra.mxu0 0.0
        %871 = vmatprep.subr.mxu0 0.0
        %872 = vmatpush2.msra.mxu0 0.0
        %873 = vmatprep.subr.mxu0 0.0
        %874 = vmatpush2.msra.mxu0 0.0
        %875 = vmatprep.subr.mxu0 0.0
        %876 = vmatpush2.msra.mxu0 0.0
        %877 = vmatprep.subr.mxu0 0.0
        %878 = vmatpush2.msra.mxu0 0.0
        %879 = vmatprep.mubr.f32.mxu0 0.0
        %880 = vmatmul.mubr.f32.gmra.mxu0 %v813
        %v881 = vpop.f32.mrf.mxu0
        %v882 = vadd.f32 0.0, %v881
        %v883 = vpop.f32.mrf.mxu0
        %884 = vdwg.mxu0
        %v885 = vadd.f32 %v646, %v882
        %886 = vrot.lane.b32.xlu0 %v399, 112
        %v887 = vpop.permute.xlu0 %886
        %888 = vrot.lane.b32.xlu0 %v399, 80
        %v889 = vpop.permute.xlu0 %888
        %v890 = vsel %vm411, %v887, 0
        %v892 = vsel %vm411, %v889, 0
        %894 = vmatprep.subr.mxu0 0.0
        %895 = vmatpush1.xpose.msra.mxu0 0.0
        %896 = vmatprep.subr.mxu0 0.0
        %897 = vmatpush1.xpose.msra.mxu0 0.0
        %898 = vmatprep.subr.mxu0 0.0
        %899 = vmatpush1.xpose.msra.mxu0 0.0
        %900 = vmatprep.subr.mxu0 0.0
        %901 = vmatpush1.xpose.msra.mxu0 0.0
        %902 = vmatprep.subr.mxu0 0.0
        %903 = vmatpush1.xpose.msra.mxu0 0.0
        %904 = vmatprep.subr.mxu0 0.0
        %905 = vmatpush1.xpose.msra.mxu0 0.0
        %906 = vmatprep.subr.mxu0 0.0
        %907 = vmatpush1.xpose.msra.mxu0 0.0
        %908 = vmatprep.subr.mxu0 0.0
        %909 = vmatpush1.xpose.msra.mxu0 0.0
        %910 = vmatprep.subr.mxu0 0.0
        %911 = vmatpush1.xpose.msra.mxu0 0.0
        %912 = vmatprep.subr.mxu0 0.0
        %913 = vmatpush1.xpose.msra.mxu0 0.0
        %914 = vmatprep.subr.mxu0 0.0
        %915 = vmatpush1.xpose.msra.mxu0 0.0
        %916 = vmatprep.subr.mxu0 0.0
        %917 = vmatpush1.xpose.msra.mxu0 0.0
        %918 = vmatprep.subr.mxu0 0.0
        %919 = vmatpush1.xpose.msra.mxu0 0.0
        %920 = vmatprep.subr.mxu0 0.0
        %921 = vmatpush1.xpose.msra.mxu0 0.0
        %922 = vmatprep.subr.mxu0 0.0
        %923 = vmatpush1.xpose.msra.mxu0 0.0
        %924 = vmatprep.subr.mxu0 0.0
        %925 = vmatpush1.xpose.msra.mxu0 %v892
        %926 = vmatprep.subr.mxu0 0.0
        %927 = vmatpush2.xpose.msra.mxu0 0.0
        %928 = vmatprep.subr.mxu0 0.0
        %929 = vmatpush2.xpose.msra.mxu0 0.0
        %930 = vmatprep.subr.mxu0 0.0
        %931 = vmatpush2.xpose.msra.mxu0 0.0
        %932 = vmatprep.subr.mxu0 0.0
        %933 = vmatpush2.xpose.msra.mxu0 0.0
        %934 = vmatprep.subr.mxu0 0.0
        %935 = vmatpush2.xpose.msra.mxu0 0.0
        %936 = vmatprep.subr.mxu0 0.0
        %937 = vmatpush2.xpose.msra.mxu0 0.0
        %938 = vmatprep.subr.mxu0 0.0
        %939 = vmatpush2.xpose.msra.mxu0 0.0
        %940 = vmatprep.subr.mxu0 0.0
        %941 = vmatpush2.xpose.msra.mxu0 0.0
        %942 = vmatprep.subr.mxu0 0.0
        %943 = vmatpush2.xpose.msra.mxu0 0.0
        %944 = vmatprep.subr.mxu0 0.0
        %945 = vmatpush2.xpose.msra.mxu0 0.0
        %946 = vmatprep.subr.mxu0 0.0
        %947 = vmatpush2.xpose.msra.mxu0 0.0
        %948 = vmatprep.subr.mxu0 0.0
        %949 = vmatpush2.xpose.msra.mxu0 0.0
        %950 = vmatprep.subr.mxu0 0.0
        %951 = vmatpush2.xpose.msra.mxu0 0.0
        %952 = vmatprep.subr.mxu0 0.0
        %953 = vmatpush2.xpose.msra.mxu0 0.0
        %954 = vmatprep.subr.mxu0 0.0
        %955 = vmatpush2.xpose.msra.mxu0 0.0
        %956 = vmatprep.subr.mxu0 0.0
        %957 = vmatpush2.xpose.msra.mxu0 0.0
        %958 = vmatprep.mubr.f32.mxu0 0.0
        %959 = vmatmul.mubr.f32.gmra.mxu0 %v890
        %v960 = vpop.f32.mrf.mxu0
        %v961 = vadd.f32 0.0, %v960
        %v962 = vpop.f32.mrf.mxu0
        %963 = vdwg.mxu0
        %v964 = vsel %vm411, %v961, -inf
        %965 = vmax.xlane.f32.xlu0 %v964
        %v966 = vpop.xlane.xlu0 %965
        %v967 = vsub.f32 %v961, %v966
        %v968 = vmul.f32 %v967, 1.442695
        %v969 = vpow.pop %v968
        %v970 = vsel %vm411, %v969, 0.0
        %971 = vadd.xlane.f32.xlu0 %v970
        %v972 = vpop.xlane.xlu0 %971
        %v973 = vrcp.pop %v972
        %v974 = vmul.f32 %v969, %v973
        %975 = vrot.lane.b32.xlu0 %v399, 48
        %v976 = vpop.permute.xlu0 %975
        %v979 = vsel %vm411, %v974, 0
        %981 = vmatprep.subr.mxu0 0.0
        %982 = vmatpush1.msra.mxu0 0.0
        %983 = vmatprep.subr.mxu0 0.0
        %984 = vmatpush1.msra.mxu0 0.0
        %985 = vmatprep.subr.mxu0 0.0
        %986 = vmatpush1.msra.mxu0 0.0
        %987 = vmatprep.subr.mxu0 0.0
        %988 = vmatpush1.msra.mxu0 0.0
        %989 = vmatprep.subr.mxu0 0.0
        %990 = vmatpush1.msra.mxu0 0.0
        %991 = vmatprep.subr.mxu0 0.0
        %992 = vmatpush1.msra.mxu0 0.0
        %993 = vmatprep.subr.mxu0 0.0
        %994 = vmatpush1.msra.mxu0 0.0
        %995 = vmatprep.subr.mxu0 0.0
        %996 = vmatpush1.msra.mxu0 0.0
        %997 = vmatprep.subr.mxu0 0.0
        %998 = vmatpush1.msra.mxu0 0.0
        %999 = vmatprep.subr.mxu0 0.0
        %1000 = vmatpush1.msra.mxu0 0.0
        %1001 = vmatprep.subr.mxu0 0.0
        %1002 = vmatpush1.msra.mxu0 0.0
        %1003 = vmatprep.subr.mxu0 0.0
        %1004 = vmatpush1.msra.mxu0 0.0
        %1005 = vmatprep.subr.mxu0 0.0
        %1006 = vmatpush1.msra.mxu0 0.0
        %1007 = vmatprep.subr.mxu0 0.0
        %1008 = vmatpush1.msra.mxu0 0.0
        %1009 = vmatprep.subr.mxu0 0.0
        %1010 = vmatpush1.msra.mxu0 0.0
        %1011 = vmatprep.subr.mxu0 0.0
        %1012 = vmatpush1.msra.mxu0 %v976
        %1013 = vmatprep.subr.mxu0 0.0
        %1014 = vmatpush2.msra.mxu0 0.0
        %1015 = vmatprep.subr.mxu0 0.0
        %1016 = vmatpush2.msra.mxu0 0.0
        %1017 = vmatprep.subr.mxu0 0.0
        %1018 = vmatpush2.msra.mxu0 0.0
        %1019 = vmatprep.subr.mxu0 0.0
        %1020 = vmatpush2.msra.mxu0 0.0
        %1021 = vmatprep.subr.mxu0 0.0
        %1022 = vmatpush2.msra.mxu0 0.0
        %1023 = vmatprep.subr.mxu0 0.0
        %1024 = vmatpush2.msra.mxu0 0.0
        %1025 = vmatprep.subr.mxu0 0.0
        %1026 = vmatpush2.msra.mxu0 0.0
        %1027 = vmatprep.subr.mxu0 0.0
        %1028 = vmatpush2.msra.mxu0 0.0
        %1029 = vmatprep.subr.mxu0 0.0
        %1030 = vmatpush2.msra.mxu0 0.0
        %1031 = vmatprep.subr.mxu0 0.0
        %1032 = vmatpush2.msra.mxu0 0.0
        %1033 = vmatprep.subr.mxu0 0.0
        %1034 = vmatpush2.msra.mxu0 0.0
        %1035 = vmatprep.subr.mxu0 0.0
        %1036 = vmatpush2.msra.mxu0 0.0
        %1037 = vmatprep.subr.mxu0 0.0
        %1038 = vmatpush2.msra.mxu0 0.0
        %1039 = vmatprep.subr.mxu0 0.0
        %1040 = vmatpush2.msra.mxu0 0.0
        %1041 = vmatprep.subr.mxu0 0.0
        %1042 = vmatpush2.msra.mxu0 0.0
        %1043 = vmatprep.subr.mxu0 0.0
        %1044 = vmatpush2.msra.mxu0 0.0
        %1045 = vmatprep.mubr.f32.mxu0 0.0
        %1046 = vmatmul.mubr.f32.gmra.mxu0 %v979
        %v1047 = vpop.f32.mrf.mxu0
        %v1048 = vadd.f32 0.0, %v1047
        %v1049 = vpop.f32.mrf.mxu0
        %1050 = vdwg.mxu0
        %v1052 = vsel %vm411, %v1048, 0
        %1054 = vmatprep.subr.mxu0 0.0
        %1055 = vmatpush1.msra.mxu0 0.0
        %1056 = vmatprep.subr.mxu0 0.0
        %1057 = vmatpush1.msra.mxu0 0.0
        %1058 = vmatprep.subr.mxu0 0.0
        %1059 = vmatpush1.msra.mxu0 0.0
        %1060 = vmatprep.subr.mxu0 0.0
        %1061 = vmatpush1.msra.mxu0 0.0
        %1062 = vmatprep.subr.mxu0 0.0
        %1063 = vmatpush1.msra.mxu0 0.0
        %1064 = vmatprep.subr.mxu0 0.0
        %1065 = vmatpush1.msra.mxu0 0.0
        %1066 = vmatprep.subr.mxu0 0.0
        %1067 = vmatpush1.msra.mxu0 0.0
        %1068 = vmatprep.subr.mxu0 0.0
        %1069 = vmatpush1.msra.mxu0 0.0
        %1070 = vmatprep.subr.mxu0 0.0
        %1071 = vmatpush1.msra.mxu0 0.0
        %1072 = vmatprep.subr.mxu0 0.0
        %1073 = vmatpush1.msra.mxu0 0.0
        %1074 = vmatprep.subr.mxu0 0.0
        %1075 = vmatpush1.msra.mxu0 0.0
        %1076 = vmatprep.subr.mxu0 0.0
        %1077 = vmatpush1.msra.mxu0 0.0
        %1078 = vmatprep.subr.mxu0 0.0
        %1079 = vmatpush1.msra.mxu0 0.0
        %1080 = vmatprep.subr.mxu0 0.0
        %1081 = vmatpush1.msra.mxu0 0.0
        %1082 = vmatprep.subr.mxu0 0.0
        %1083 = vmatpush1.msra.mxu0 0.0
        %1084 = vmatprep.subr.mxu0 0.0
        %1085 = vmatpush1.msra.mxu0 %v317
        %1086 = vmatprep.subr.mxu0 0.0
        %1087 = vmatpush2.msra.mxu0 0.0
        %1088 = vmatprep.subr.mxu0 0.0
        %1089 = vmatpush2.msra.mxu0 0.0
        %1090 = vmatprep.subr.mxu0 0.0
        %1091 = vmatpush2.msra.mxu0 0.0
        %1092 = vmatprep.subr.mxu0 0.0
        %1093 = vmatpush2.msra.mxu0 0.0
        %1094 = vmatprep.subr.mxu0 0.0
        %1095 = vmatpush2.msra.mxu0 0.0
        %1096 = vmatprep.subr.mxu0 0.0
        %1097 = vmatpush2.msra.mxu0 0.0
        %1098 = vmatprep.subr.mxu0 0.0
        %1099 = vmatpush2.msra.mxu0 0.0
        %1100 = vmatprep.subr.mxu0 0.0
        %1101 = vmatpush2.msra.mxu0 0.0
        %1102 = vmatprep.subr.mxu0 0.0
        %1103 = vmatpush2.msra.mxu0 0.0
        %1104 = vmatprep.subr.mxu0 0.0
        %1105 = vmatpush2.msra.mxu0 0.0
        %1106 = vmatprep.subr.mxu0 0.0
        %1107 = vmatpush2.msra.mxu0 0.0
        %1108 = vmatprep.subr.mxu0 0.0
        %1109 = vmatpush2.msra.mxu0 0.0
        %1110 = vmatprep.subr.mxu0 0.0
        %1111 = vmatpush2.msra.mxu0 0.0
        %1112 = vmatprep.subr.mxu0 0.0
        %1113 = vmatpush2.msra.mxu0 0.0
        %1114 = vmatprep.subr.mxu0 0.0
        %1115 = vmatpush2.msra.mxu0 0.0
        %1116 = vmatprep.subr.mxu0 0.0
        %1117 = vmatpush2.msra.mxu0 0.0
        %1118 = vmatprep.mubr.f32.mxu0 0.0
        %1119 = vmatmul.mubr.f32.gmra.mxu0 %v1052
        %v1120 = vpop.f32.mrf.mxu0
        %v1121 = vadd.f32 0.0, %v1120
        %v1122 = vpop.f32.mrf.mxu0
        %1123 = vdwg.mxu0
        %v1124 = vadd.f32 %v885, %v1121
        %1125 = vrot.lane.b32.xlu0 %v399, 104
        %v1126 = vpop.permute.xlu0 %1125
        %1127 = vrot.lane.b32.xlu0 %v399, 72
        %v1128 = vpop.permute.xlu0 %1127
        %v1129 = vsel %vm411, %v1126, 0
        %v1131 = vsel %vm411, %v1128, 0
        %1133 = vmatprep.subr.mxu0 0.0
        %1134 = vmatpush1.xpose.msra.mxu0 0.0
        %1135 = vmatprep.subr.mxu0 0.0
        %1136 = vmatpush1.xpose.msra.mxu0 0.0
        %1137 = vmatprep.subr.mxu0 0.0
        %1138 = vmatpush1.xpose.msra.mxu0 0.0
        %1139 = vmatprep.subr.mxu0 0.0
        %1140 = vmatpush1.xpose.msra.mxu0 0.0
        %1141 = vmatprep.subr.mxu0 0.0
        %1142 = vmatpush1.xpose.msra.mxu0 0.0
        %1143 = vmatprep.subr.mxu0 0.0
        %1144 = vmatpush1.xpose.msra.mxu0 0.0
        %1145 = vmatprep.subr.mxu0 0.0
        %1146 = vmatpush1.xpose.msra.mxu0 0.0
        %1147 = vmatprep.subr.mxu0 0.0
        %1148 = vmatpush1.xpose.msra.mxu0 0.0
        %1149 = vmatprep.subr.mxu0 0.0
        %1150 = vmatpush1.xpose.msra.mxu0 0.0
        %1151 = vmatprep.subr.mxu0 0.0
        %1152 = vmatpush1.xpose.msra.mxu0 0.0
        %1153 = vmatprep.subr.mxu0 0.0
        %1154 = vmatpush1.xpose.msra.mxu0 0.0
        %1155 = vmatprep.subr.mxu0 0.0
        %1156 = vmatpush1.xpose.msra.mxu0 0.0
        %1157 = vmatprep.subr.mxu0 0.0
        %1158 = vmatpush1.xpose.msra.mxu0 0.0
        %1159 = vmatprep.subr.mxu0 0.0
        %1160 = vmatpush1.xpose.msra.mxu0 0.0
        %1161 = vmatprep.subr.mxu0 0.0
        %1162 = vmatpush1.xpose.msra.mxu0 0.0
        %1163 = vmatprep.subr.mxu0 0.0
        %1164 = vmatpush1.xpose.msra.mxu0 %v1131
        %1165 = vmatprep.subr.mxu0 0.0
        %1166 = vmatpush2.xpose.msra.mxu0 0.0
        %1167 = vmatprep.subr.mxu0 0.0
        %1168 = vmatpush2.xpose.msra.mxu0 0.0
        %1169 = vmatprep.subr.mxu0 0.0
        %1170 = vmatpush2.xpose.msra.mxu0 0.0
        %1171 = vmatprep.subr.mxu0 0.0
        %1172 = vmatpush2.xpose.msra.mxu0 0.0
        %1173 = vmatprep.subr.mxu0 0.0
        %1174 = vmatpush2.xpose.msra.mxu0 0.0
        %1175 = vmatprep.subr.mxu0 0.0
        %1176 = vmatpush2.xpose.msra.mxu0 0.0
        %1177 = vmatprep.subr.mxu0 0.0
        %1178 = vmatpush2.xpose.msra.mxu0 0.0
        %1179 = vmatprep.subr.mxu0 0.0
        %1180 = vmatpush2.xpose.msra.mxu0 0.0
        %1181 = vmatprep.subr.mxu0 0.0
        %1182 = vmatpush2.xpose.msra.mxu0 0.0
        %1183 = vmatprep.subr.mxu0 0.0
        %1184 = vmatpush2.xpose.msra.mxu0 0.0
        %1185 = vmatprep.subr.mxu0 0.0
        %1186 = vmatpush2.xpose.msra.mxu0 0.0
        %1187 = vmatprep.subr.mxu0 0.0
        %1188 = vmatpush2.xpose.msra.mxu0 0.0
        %1189 = vmatprep.subr.mxu0 0.0
        %1190 = vmatpush2.xpose.msra.mxu0 0.0
        %1191 = vmatprep.subr.mxu0 0.0
        %1192 = vmatpush2.xpose.msra.mxu0 0.0
        %1193 = vmatprep.subr.mxu0 0.0
        %1194 = vmatpush2.xpose.msra.mxu0 0.0
        %1195 = vmatprep.subr.mxu0 0.0
        %1196 = vmatpush2.xpose.msra.mxu0 0.0
        %1197 = vmatprep.mubr.f32.mxu0 0.0
        %1198 = vmatmul.mubr.f32.gmra.mxu0 %v1129
        %v1199 = vpop.f32.mrf.mxu0
        %v1200 = vadd.f32 0.0, %v1199
        %v1201 = vpop.f32.mrf.mxu0
        %1202 = vdwg.mxu0
        %v1203 = vsel %vm411, %v1200, -inf
        %1204 = vmax.xlane.f32.xlu0 %v1203
        %v1205 = vpop.xlane.xlu0 %1204
        %v1206 = vsub.f32 %v1200, %v1205
        %v1207 = vmul.f32 %v1206, 1.442695
        %v1208 = vpow.pop %v1207
        %v1209 = vsel %vm411, %v1208, 0.0
        %1210 = vadd.xlane.f32.xlu0 %v1209
        %v1211 = vpop.xlane.xlu0 %1210
        %v1212 = vrcp.pop %v1211
        %v1213 = vmul.f32 %v1208, %v1212
        %1214 = vrot.lane.b32.xlu0 %v399, 40
        %v1215 = vpop.permute.xlu0 %1214
        %v1218 = vsel %vm411, %v1213, 0
        %1220 = vmatprep.subr.mxu0 0.0
        %1221 = vmatpush1.msra.mxu0 0.0
        %1222 = vmatprep.subr.mxu0 0.0
        %1223 = vmatpush1.msra.mxu0 0.0
        %1224 = vmatprep.subr.mxu0 0.0
        %1225 = vmatpush1.msra.mxu0 0.0
        %1226 = vmatprep.subr.mxu0 0.0
        %1227 = vmatpush1.msra.mxu0 0.0
        %1228 = vmatprep.subr.mxu0 0.0
        %1229 = vmatpush1.msra.mxu0 0.0
        %1230 = vmatprep.subr.mxu0 0.0
        %1231 = vmatpush1.msra.mxu0 0.0
        %1232 = vmatprep.subr.mxu0 0.0
        %1233 = vmatpush1.msra.mxu0 0.0
        %1234 = vmatprep.subr.mxu0 0.0
        %1235 = vmatpush1.msra.mxu0 0.0
        %1236 = vmatprep.subr.mxu0 0.0
        %1237 = vmatpush1.msra.mxu0 0.0
        %1238 = vmatprep.subr.mxu0 0.0
        %1239 = vmatpush1.msra.mxu0 0.0
        %1240 = vmatprep.subr.mxu0 0.0
        %1241 = vmatpush1.msra.mxu0 0.0
        %1242 = vmatprep.subr.mxu0 0.0
        %1243 = vmatpush1.msra.mxu0 0.0
        %1244 = vmatprep.subr.mxu0 0.0
        %1245 = vmatpush1.msra.mxu0 0.0
        %1246 = vmatprep.subr.mxu0 0.0
        %1247 = vmatpush1.msra.mxu0 0.0
        %1248 = vmatprep.subr.mxu0 0.0
        %1249 = vmatpush1.msra.mxu0 0.0
        %1250 = vmatprep.subr.mxu0 0.0
        %1251 = vmatpush1.msra.mxu0 %v1215
        %1252 = vmatprep.subr.mxu0 0.0
        %1253 = vmatpush2.msra.mxu0 0.0
        %1254 = vmatprep.subr.mxu0 0.0
        %1255 = vmatpush2.msra.mxu0 0.0
        %1256 = vmatprep.subr.mxu0 0.0
        %1257 = vmatpush2.msra.mxu0 0.0
        %1258 = vmatprep.subr.mxu0 0.0
        %1259 = vmatpush2.msra.mxu0 0.0
        %1260 = vmatprep.subr.mxu0 0.0
        %1261 = vmatpush2.msra.mxu0 0.0
        %1262 = vmatprep.subr.mxu0 0.0
        %1263 = vmatpush2.msra.mxu0 0.0
        %1264 = vmatprep.subr.mxu0 0.0
        %1265 = vmatpush2.msra.mxu0 0.0
        %1266 = vmatprep.subr.mxu0 0.0
        %1267 = vmatpush2.msra.mxu0 0.0
        %1268 = vmatprep.subr.mxu0 0.0
        %1269 = vmatpush2.msra.mxu0 0.0
        %1270 = vmatprep.subr.mxu0 0.0
        %1271 = vmatpush2.msra.mxu0 0.0
        %1272 = vmatprep.subr.mxu0 0.0
        %1273 = vmatpush2.msra.mxu0 0.0
        %1274 = vmatprep.subr.mxu0 0.0
        %1275 = vmatpush2.msra.mxu0 0.0
        %1276 = vmatprep.subr.mxu0 0.0
        %1277 = vmatpush2.msra.mxu0 0.0
        %1278 = vmatprep.subr.mxu0 0.0
        %1279 = vmatpush2.msra.mxu0 0.0
        %1280 = vmatprep.subr.mxu0 0.0
        %1281 = vmatpush2.msra.mxu0 0.0
        %1282 = vmatprep.subr.mxu0 0.0
        %1283 = vmatpush2.msra.mxu0 0.0
        %1284 = vmatprep.mubr.f32.mxu0 0.0
        %1285 = vmatmul.mubr.f32.gmra.mxu0 %v1218
        %v1286 = vpop.f32.mrf.mxu0
        %v1287 = vadd.f32 0.0, %v1286
        %v1288 = vpop.f32.mrf.mxu0
        %1289 = vdwg.mxu0
        %v1291 = vsel %vm411, %v1287, 0
        %1293 = vmatprep.subr.mxu0 0.0
        %1294 = vmatpush1.msra.mxu0 0.0
        %1295 = vmatprep.subr.mxu0 0.0
        %1296 = vmatpush1.msra.mxu0 0.0
        %1297 = vmatprep.subr.mxu0 0.0
        %1298 = vmatpush1.msra.mxu0 0.0
        %1299 = vmatprep.subr.mxu0 0.0
        %1300 = vmatpush1.msra.mxu0 0.0
        %1301 = vmatprep.subr.mxu0 0.0
        %1302 = vmatpush1.msra.mxu0 0.0
        %1303 = vmatprep.subr.mxu0 0.0
        %1304 = vmatpush1.msra.mxu0 0.0
        %1305 = vmatprep.subr.mxu0 0.0
        %1306 = vmatpush1.msra.mxu0 0.0
        %1307 = vmatprep.subr.mxu0 0.0
        %1308 = vmatpush1.msra.mxu0 0.0
        %1309 = vmatprep.subr.mxu0 0.0
        %1310 = vmatpush1.msra.mxu0 0.0
        %1311 = vmatprep.subr.mxu0 0.0
        %1312 = vmatpush1.msra.mxu0 0.0
        %1313 = vmatprep.subr.mxu0 0.0
        %1314 = vmatpush1.msra.mxu0 0.0
        %1315 = vmatprep.subr.mxu0 0.0
        %1316 = vmatpush1.msra.mxu0 0.0
        %1317 = vmatprep.subr.mxu0 0.0
        %1318 = vmatpush1.msra.mxu0 0.0
        %1319 = vmatprep.subr.mxu0 0.0
        %1320 = vmatpush1.msra.mxu0 0.0
        %1321 = vmatprep.subr.mxu0 0.0
        %1322 = vmatpush1.msra.mxu0 0.0
        %1323 = vmatprep.subr.mxu0 0.0
        %1324 = vmatpush1.msra.mxu0 %v318
        %1325 = vmatprep.subr.mxu0 0.0
        %1326 = vmatpush2.msra.mxu0 0.0
        %1327 = vmatprep.subr.mxu0 0.0
        %1328 = vmatpush2.msra.mxu0 0.0
        %1329 = vmatprep.subr.mxu0 0.0
        %1330 = vmatpush2.msra.mxu0 0.0
        %1331 = vmatprep.subr.mxu0 0.0
        %1332 = vmatpush2.msra.mxu0 0.0
        %1333 = vmatprep.subr.mxu0 0.0
        %1334 = vmatpush2.msra.mxu0 0.0
        %1335 = vmatprep.subr.mxu0 0.0
        %1336 = vmatpush2.msra.mxu0 0.0
        %1337 = vmatprep.subr.mxu0 0.0
        %1338 = vmatpush2.msra.mxu0 0.0
        %1339 = vmatprep.subr.mxu0 0.0
        %1340 = vmatpush2.msra.mxu0 0.0
        %1341 = vmatprep.subr.mxu0 0.0
        %1342 = vmatpush2.msra.mxu0 0.0
        %1343 = vmatprep.subr.mxu0 0.0
        %1344 = vmatpush2.msra.mxu0 0.0
        %1345 = vmatprep.subr.mxu0 0.0
        %1346 = vmatpush2.msra.mxu0 0.0
        %1347 = vmatprep.subr.mxu0 0.0
        %1348 = vmatpush2.msra.mxu0 0.0
        %1349 = vmatprep.subr.mxu0 0.0
        %1350 = vmatpush2.msra.mxu0 0.0
        %1351 = vmatprep.subr.mxu0 0.0
        %1352 = vmatpush2.msra.mxu0 0.0
        %1353 = vmatprep.subr.mxu0 0.0
        %1354 = vmatpush2.msra.mxu0 0.0
        %1355 = vmatprep.subr.mxu0 0.0
        %1356 = vmatpush2.msra.mxu0 0.0
        %1357 = vmatprep.mubr.f32.mxu0 0.0
        %1358 = vmatmul.mubr.f32.gmra.mxu0 %v1291
        %v1359 = vpop.f32.mrf.mxu0
        %v1360 = vadd.f32 0.0, %v1359
        %v1361 = vpop.f32.mrf.mxu0
        %1362 = vdwg.mxu0
        %v1363 = vadd.f32 %v1124, %v1360
        %1364 = vst.msk [vmem:[%s308] sm:$0xff] %vm328, %v1363
        %s1365 = sand.u32 %s164, 1
        %s1366 = scalar_lea.sflag [#allocation4], %s1365
        %s1367 = sand.u32 %s164, 1
        %s1368 = smul.addr %s1367, 8
        %s1369 = scalar_lea.vmem [#allocation10], %s1368
        // Predicated region
        $region61: #{tpu_custom_call.1} parent=43 // pred_check
          %p1370 = pneg %p174
        $region62: #{tpu_custom_call.1} parent=43 // pred_check_branch
          %1372 = sbr.rel (%p1370) target = $region64
        $region63: #{tpu_custom_call.1} parent=43 // pred_region
          %s1374 = ssub.s32 128, 128
          %1375 = vsyncadd %s1366, %s1374
          %s1376 = smul.addr %s25, 128
          %s1377 = scalar_lea.hbm %s6, %s1376
          %s1379 = sshll.u32 %s1369, 4
          %s1380 = int_to_ptr.vmem [resolvable:$true] %s1379
          %1382 = dma.vmem_to_hbm [thread:$0]  %s1380, 128, %s1377, %s1366
        $region64: #{tpu_custom_call.1} parent=43 // pred_fallthru
          _
      $region44: #{tpu_custom_call.1} parent=5 // pred_fallthru
        _
      %p1383 = scmp.le.s32.totalorder 2, %s20
      // Predicated region
      $region65: #{tpu_custom_call.1} parent=5 // pred_check
        %p1384 = pneg %p1383
      $region66: #{tpu_custom_call.1} parent=5 // pred_check_branch
        %1386 = sbr.rel (%p1384) target = $region68
      $region67: #{tpu_custom_call.1} parent=5 // pred_region
        %s1387 = ssub.s32 %s20, 2
        // Predicated region
        $region69: #{tpu_custom_call.1} parent=67 // pred_check
          %p1388 = pneg %p180
        $region70: #{tpu_custom_call.1} parent=67 // pred_check_branch
          %1390 = sbr.rel (%p1388) target = $region72
        $region71: #{tpu_custom_call.1} parent=67 // pred_region
          %s1391 = sand.u32 %s165, 1
          %s1392 = scalar_lea.sflag [#allocation4], %s1391
          %s1393 = sand.u32 %s165, 1
          %s1394 = smul.addr %s1393, 8
          %s1395 = scalar_lea.vmem [#allocation10], %s1394
          %1396 = dma.done %s1392, 128
        $region72: #{tpu_custom_call.1} parent=67 // pred_fallthru
          _
      $region68: #{tpu_custom_call.1} parent=5 // pred_fallthru
        _
    $region6: #{tpu_custom_call.1} parent=1 // loop_footer
      %s24 = sadd.s32 1, %s20
    $region7: #{tpu_custom_call.1} parent=1 // loop_footer_branch
      %19 = sbr.rel target = $region3
    $region8: #{tpu_custom_call.1} parent=1 // loop_exit
      _
    %1397 = vsyncpa [#allocation3], 1
    %s1398 = scalar_lea.sflag [#allocation3], 1
    %1399 = vsyncpa %s1398, 1
    %1400 = vsyncpa [#allocation6], 1
    %1401 = vsyncpa [#allocation9], 1
    %1402 = vsyncpa [#allocation4], 1
    %s1403 = scalar_lea.sflag [#allocation4], 1
    %1404 = vsyncpa %s1403, 1

</llo_original>
